<compile_context>
chip_gen: v6e
topology: v6e:2x2x1
jax: 0.10.0
libtpu: 0.0.40
codegen_flags: <defaults>
</compile_context>

<pallas_src>
from functools import partial

import jax
import jax.numpy as jnp
from jax.experimental import pallas as pl
from jax.experimental.pallas import tpu as pltpu

# ----------------------------- configuration ------------------------------
WORD_VOCAB = 50
POS_VOCAB = 20
WORD_EMB = 16
POS_EMB = 16
CTX_DIM = 32          # context_linear_dim
LSTM_HID = 32         # lstm_hid_dims (unidirectional -> single_pass_dims == 32)
PADDING_IDX = 0

TAB_ROWS = 128                    # combined one-hot table rows (padded to lane width)
BIAS_COL = WORD_VOCAB + POS_VOCAB  # = 70, row holding context_linear bias
assert BIAS_COL + 1 <= TAB_ROWS

BATCH = 2
SEQ = 8
BATCH_PAD = 8                     # sublane width


# ------------------------ fused ContextEncoder kernel ----------------------
def context_encoder_kernel(wids_ref, pids_ref, tab_ref, wih_ref, whh_ref,
                           blstm_ref, out_ref, *, bsz_pad, seq):
    # wids_ref / pids_ref : (N, 1) int32 ids, N = seq*bsz_pad, time-major,
    #                       batch padded to bsz_pad with PADDING_IDX
    # tab_ref   : (128, CTX) combined folded table (word | pos | bias | zeros)
    # wih_ref   : (CTX, 4H)  W_ih.T ; whh_ref : (H, 4H)  W_hh.T
    # blstm_ref : (1, 4H)    b_ih + b_hh
    # out_ref   : (N, H)     per-step hidden states, rows in (t*bsz_pad + b) order
    n = wids_ref.shape[0]
    tab_rows = tab_ref.shape[0]
    hdim = whh_ref.shape[0]

    # Single fused one-hot selector: 1.0 at the word column, the (offset) pos
    # column, and the constant bias column.  Padding ids hit zero table rows.
    col = jax.lax.broadcasted_iota(jnp.int32, (n, tab_rows), 1)
    sel = ((col == wids_ref[...])
           | (col == (pids_ref[...] + WORD_VOCAB))
           | (col == BIAS_COL)).astype(jnp.float32)          # (N, 128)

    # tanh(context_linear(cat(word_emb, pos_emb))) == one K=128 matmul.
    iv = jnp.tanh(jnp.dot(sel, tab_ref[...],
                          preferred_element_type=jnp.float32))  # (N, CTX)

    # Hoisted LSTM input projection for all timesteps at once.
    xp = (jnp.dot(iv, wih_ref[...], preferred_element_type=jnp.float32)
          + blstm_ref[...])                                      # (N, 4H)

    # Constant gate masks (hoisted out of the loop): g block uses tanh(x),
    # i/f/o blocks use sigmoid(x) = 0.5*tanh(x/2) + 0.5.
    lane = jax.lax.broadcasted_iota(jnp.int32, (1, 4 * hdim), 1)
    is_g = (lane >= 2 * hdim) & (lane < 3 * hdim)
    scale = jnp.where(is_g, 1.0, 0.5)    # pre-scale AND post-scale
    offset = jnp.where(is_g, 0.0, 0.5)   # post-offset

    # init_hidden(): zero initial hidden / cell state; carried in vregs.
    h = jnp.zeros((bsz_pad, hdim), jnp.float32)
    c = jnp.zeros((bsz_pad, hdim), jnp.float32)

    # Static unrolled recurrence; each per-step slice is a sublane-aligned
    # 8-row block.  Padded rows compute garbage independently and are
    # dropped by the wrapper.
    hs = []
    for t in range(seq):
        gates = xp[t * bsz_pad:(t + 1) * bsz_pad, :] + jnp.dot(
            h, whh_ref[...], preferred_element_type=jnp.float32)   # (8, 4H)
        act = jnp.tanh(gates * scale) * scale + offset  # ONE EUP pass / step
        i = act[:, 0 * hdim:1 * hdim]
        f = act[:, 1 * hdim:2 * hdim]
        g = act[:, 2 * hdim:3 * hdim]
        o = act[:, 3 * hdim:4 * hdim]
        c = f * c + i * g
        h = o * jnp.tanh(c)
        hs.append(h)

    # Single full-width store (no per-step masked stores into one tile).
    out_ref[...] = jnp.concatenate(hs, axis=0)


def context_encoder_forward(words, pos, p):
    """words/pos: (batch, seq) int32 token ids -> (batch, seq, lstm_hid_dims)."""
    bsz, seq = words.shape                      # self.batch_size = len(sequences)
    n_real = bsz * seq
    t_steps = n_real // bsz                     # == seq (mirrors .view(-1, B, C))
    bp = BATCH_PAD

    # Time-major ids: row (t, b) = flat row t*bsz + b of the (b*S+s)-ordered
    # flattening -- exactly the module's .view(-1, batch, C) row mixing.
    w_tm = words.reshape(n_real).astype(jnp.int32).reshape(t_steps, bsz)
    p_tm = pos.reshape(n_real).astype(jnp.int32).reshape(t_steps, bsz)
    # Pad batch dim to 8 sublanes with PADDING_IDX (rows dropped afterwards).
    w_pad = jnp.full((t_steps, bp), PADDING_IDX, jnp.int32).at[:, :bsz].set(w_tm)
    p_pad = jnp.full((t_steps, bp), PADDING_IDX, jnp.int32).at[:, :bsz].set(p_tm)
    wids = w_pad.reshape(t_steps * bp, 1)
    pids = p_pad.reshape(t_steps * bp, 1)

    vmem = pl.BlockSpec(memory_space=pltpu.MemorySpace.VMEM)
    out = pl.pallas_call(
        partial(context_encoder_kernel, bsz_pad=bp, seq=t_steps),
        out_shape=jax.ShapeDtypeStruct((t_steps * bp, LSTM_HID), jnp.float32),
        in_specs=[vmem] * 6,
        out_specs=vmem,
    )(wids, pids, p["table"], p["wih_t"], p["whh_t"], p["b_lstm"])

    # Drop padded batch rows; rows are in (t*B + b) order == lstm_out (T,B,H)
    # row-major; reshape mirrors out.view(batch_size, -1, lstm_hid_dims).
    out = out.reshape(t_steps, bp, LSTM_HID)[:, :bsz, :]
    return out.reshape(bsz, seq, LSTM_HID)


# ----------------------------- parameters ----------------------------------
def xavier_normal(key, shape):
    fan_out, fan_in = shape
    std = (2.0 / (fan_in + fan_out)) ** 0.5
    return std * jax.random.normal(key, shape, jnp.float32)


def init_params(key):
    ks = jax.random.split(key, 8)
    # nn.Embedding weights, xavier_normal, padding row zeroed
    wtab = xavier_normal(ks[0], (WORD_VOCAB, WORD_EMB)).at[PADDING_IDX].set(0.0)
    ptab = xavier_normal(ks[1], (POS_VOCAB, POS_EMB)).at[PADDING_IDX].set(0.0)
    # context_linear: weight (CTX, Dw+Dp) xavier, small random bias
    wl = xavier_normal(ks[2], (CTX_DIM, WORD_EMB + POS_EMB))
    bl = 0.01 * jax.random.normal(ks[3], (CTX_DIM,), jnp.float32)
    # nn.LSTM params: uniform(-k, k), k = 1/sqrt(H); gate order i, f, g, o
    k = 1.0 / (LSTM_HID ** 0.5)
    wih = jax.random.uniform(ks[4], (4 * LSTM_HID, CTX_DIM), jnp.float32, -k, k)
    whh = jax.random.uniform(ks[5], (4 * LSTM_HID, LSTM_HID), jnp.float32, -k, k)
    bih = jax.random.uniform(ks[6], (4 * LSTM_HID,), jnp.float32, -k, k)
    bhh = jax.random.uniform(ks[7], (4 * LSTM_HID,), jnp.float32, -k, k)

    wl_t = wl.T                                          # (Dw+Dp, CTX)
    # Combined 128-row table with context_linear folded into both embedding
    # tables and the bias placed at row BIAS_COL (padding rows remain zero).
    table = jnp.zeros((TAB_ROWS, CTX_DIM), jnp.float32)
    table = table.at[:WORD_VOCAB].set(wtab @ wl_t[:WORD_EMB])
    table = table.at[WORD_VOCAB:WORD_VOCAB + POS_VOCAB].set(ptab @ wl_t[WORD_EMB:])
    table = table.at[BIAS_COL].set(bl)

    return dict(
        # fused/folded params used by the kernel
        table=table,                                      # (128, CTX)
        wih_t=wih.T, whh_t=whh.T,                         # (CTX,4H), (H,4H)
        b_lstm=(bih + bhh).reshape(1, 4 * LSTM_HID),
        # unfolded copies for the pure-JAX reference
        wtab=wtab, ptab=ptab, wl_t=wl_t, bl=bl.reshape(1, CTX_DIM),
    )


# ------------------------------ reference ----------------------------------
def reference_forward(words, pos, p):
    """Pure-JAX replica of the PyTorch module's forward (unfolded params)."""
    bsz = words.shape[0]
    wemb = p["wtab"][words]
    pemb = p["ptab"][pos]
    cat = jnp.concatenate([wemb, pemb], axis=-1)
    iv = jnp.tanh(cat @ p["wl_t"] + p["bl"].reshape(-1))
    x = iv.reshape(-1, bsz, CTX_DIM)                     # .view(-1, batch, C)
    h = jnp.zeros((bsz, LSTM_HID), jnp.float32)
    c = jnp.zeros((bsz, LSTM_HID), jnp.float32)
    outs = []
    for t in range(x.shape[0]):
        gates = x[t] @ p["wih_t"] + h @ p["whh_t"] + p["b_lstm"].reshape(-1)
        i = jax.nn.sigmoid(gates[:, 0 * LSTM_HID:1 * LSTM_HID])
        f = jax.nn.sigmoid(gates[:, 1 * LSTM_HID:2 * LSTM_HID])
        g = jnp.tanh(gates[:, 2 * LSTM_HID:3 * LSTM_HID])
        o = jax.nn.sigmoid(gates[:, 3 * LSTM_HID:4 * LSTM_HID])
        c = f * c + i * g
        h = o * jnp.tanh(c)
        outs.append(h)
    return jnp.stack(outs, axis=0).reshape(bsz, -1, LSTM_HID)


# --------------------------------- main -------------------------------------
if __name__ == "__main__":
    key = jax.random.PRNGKey(0)
    kp, kw, kpos = jax.random.split(key, 3)
    params = init_params(kp)

    words = jax.random.randint(kw, (BATCH, SEQ), 0, WORD_VOCAB, jnp.int32)
    pos = jax.random.randint(kpos, (BATCH, SEQ), 0, POS_VOCAB, jnp.int32)
    # include padding tokens to exercise padding_idx behaviour
    words = words.at[0, 0].set(PADDING_IDX)
    pos = pos.at[1, -1].set(PADDING_IDX)

    out = context_encoder_forward(words, pos, params)
    out = jax.block_until_ready(out)

    ref = reference_forward(words, pos, params)
    assert out.shape == (BATCH, SEQ, LSTM_HID), out.shape
    assert jnp.allclose(out, ref, rtol=2e-4, atol=2e-4), float(
        jnp.max(jnp.abs(out - ref)))

    print("KERNEL_OK")
</pallas_src>

<mosaic_0001>
module attributes {stable_mosaic.version = 11 : i64} {
  func.func @context_encoder_kernel(%arg0: memref<64x1xi32, #tpu.memory_space<vmem>>, %arg1: memref<64x1xi32, #tpu.memory_space<vmem>>, %arg2: memref<128x32xf32, #tpu.memory_space<vmem>>, %arg3: memref<32x128xf32, #tpu.memory_space<vmem>>, %arg4: memref<32x128xf32, #tpu.memory_space<vmem>>, %arg5: memref<1x128xf32, #tpu.memory_space<vmem>>, %arg6: memref<64x32xf32, #tpu.memory_space<vmem>>) attributes {dimension_semantics = [], scalar_prefetch = 0 : i64, scratch_operands = 0 : i64, tpu.core_type = #tpu.core_type<tc>} {
    %0 = tpu.iota {dimensions = array<i32: 1>} : vector<64x128xi32>
    %c0 = arith.constant 0 : index
    %c0_0 = arith.constant 0 : index
    %1 = vector.load %arg0[%c0, %c0_0] : memref<64x1xi32, #tpu.memory_space<vmem>>, vector<64x1xi32>
    %2 = vector.broadcast %1 : vector<64x1xi32> to vector<64x128xi32>
    %3 = arith.cmpi eq, %0, %2 : vector<64x128xi32>
    %c0_1 = arith.constant 0 : index
    %c0_2 = arith.constant 0 : index
    %4 = vector.load %arg1[%c0_1, %c0_2] : memref<64x1xi32, #tpu.memory_space<vmem>>, vector<64x1xi32>
    %c50_i32 = arith.constant 50 : i32
    %5 = vector.broadcast %c50_i32 : i32 to vector<64x1xi32>
    %6 = arith.addi %4, %5 : vector<64x1xi32>
    %7 = vector.broadcast %6 : vector<64x1xi32> to vector<64x128xi32>
    %8 = arith.cmpi eq, %0, %7 : vector<64x128xi32>
    %9 = arith.ori %3, %8 : vector<64x128xi1>
    %c70_i32 = arith.constant 70 : i32
    %10 = vector.broadcast %c70_i32 : i32 to vector<64x128xi32>
    %11 = arith.cmpi eq, %0, %10 : vector<64x128xi32>
    %12 = arith.ori %9, %11 : vector<64x128xi1>
    %13 = arith.extui %12 : vector<64x128xi1> to vector<64x128xi32>
    %14 = arith.sitofp %13 : vector<64x128xi32> to vector<64x128xf32>
    %c0_3 = arith.constant 0 : index
    %c0_4 = arith.constant 0 : index
    %15 = vector.load %arg2[%c0_3, %c0_4] : memref<128x32xf32, #tpu.memory_space<vmem>>, vector<128x32xf32>
    %cst = arith.constant dense<0.000000e+00> : vector<64x32xf32>
    %16 = tpu.matmul %14, %15, %cst {dimension_numbers = #tpu.dot_dimension_numbers<[1], [0], [0], [1], [0, 0, 1, 1], [], []>} : vector<64x128xf32>, vector<128x32xf32>, vector<64x32xf32> -> vector<64x32xf32>
    %17 = math.tanh %16 : vector<64x32xf32>
    %c0_5 = arith.constant 0 : index
    %c0_6 = arith.constant 0 : index
    %18 = vector.load %arg3[%c0_5, %c0_6] : memref<32x128xf32, #tpu.memory_space<vmem>>, vector<32x128xf32>
    %cst_7 = arith.constant dense<0.000000e+00> : vector<64x128xf32>
    %19 = tpu.matmul %17, %18, %cst_7 {dimension_numbers = #tpu.dot_dimension_numbers<[1], [0], [0], [1], [0, 0, 1, 1], [], []>} : vector<64x32xf32>, vector<32x128xf32>, vector<64x128xf32> -> vector<64x128xf32>
    %c0_8 = arith.constant 0 : index
    %c0_9 = arith.constant 0 : index
    %20 = vector.load %arg5[%c0_8, %c0_9] : memref<1x128xf32, #tpu.memory_space<vmem>>, vector<1x128xf32>
    %21 = vector.broadcast %20 : vector<1x128xf32> to vector<64x128xf32>
    %22 = arith.addf %19, %21 : vector<64x128xf32>
    %23 = tpu.iota {dimensions = array<i32: 1>} : vector<1x128xi32>
    %c64_i32 = arith.constant 64 : i32
    %24 = vector.broadcast %c64_i32 : i32 to vector<1x128xi32>
    %25 = arith.cmpi sge, %23, %24 : vector<1x128xi32>
    %c96_i32 = arith.constant 96 : i32
    %26 = vector.broadcast %c96_i32 : i32 to vector<1x128xi32>
    %27 = arith.cmpi slt, %23, %26 : vector<1x128xi32>
    %28 = arith.andi %25, %27 : vector<1x128xi1>
    %cst_10 = arith.constant 1.000000e+00 : f32
    %cst_11 = arith.constant 5.000000e-01 : f32
    %29 = vector.broadcast %cst_10 : f32 to vector<1x128xf32>
    %30 = vector.broadcast %cst_11 : f32 to vector<1x128xf32>
    %31 = arith.select %28, %29, %30 : vector<1x128xi1>, vector<1x128xf32>
    %cst_12 = arith.constant 0.000000e+00 : f32
    %cst_13 = arith.constant 5.000000e-01 : f32
    %32 = vector.broadcast %cst_12 : f32 to vector<1x128xf32>
    %33 = vector.broadcast %cst_13 : f32 to vector<1x128xf32>
    %34 = arith.select %28, %32, %33 : vector<1x128xi1>, vector<1x128xf32>
    %cst_14 = arith.constant 0.000000e+00 : f32
    %35 = vector.broadcast %cst_14 : f32 to vector<8x32xf32>
    %cst_15 = arith.constant 0.000000e+00 : f32
    %36 = vector.broadcast %cst_15 : f32 to vector<8x32xf32>
    %37 = vector.extract_strided_slice %22 {offsets = [0, 0], sizes = [8, 128], strides = [1, 1]} : vector<64x128xf32> to vector<8x128xf32>
    %c0_16 = arith.constant 0 : index
    %c0_17 = arith.constant 0 : index
    %38 = vector.load %arg4[%c0_16, %c0_17] : memref<32x128xf32, #tpu.memory_space<vmem>>, vector<32x128xf32>
    %cst_18 = arith.constant dense<0.000000e+00> : vector<8x128xf32>
    %39 = tpu.matmul %35, %38, %cst_18 {dimension_numbers = #tpu.dot_dimension_numbers<[1], [0], [0], [1], [0, 0, 1, 1], [], []>} : vector<8x32xf32>, vector<32x128xf32>, vector<8x128xf32> -> vector<8x128xf32>
    %40 = arith.addf %37, %39 : vector<8x128xf32>
    %41 = vector.broadcast %31 : vector<1x128xf32> to vector<8x128xf32>
    %42 = arith.mulf %40, %41 : vector<8x128xf32>
    %43 = math.tanh %42 : vector<8x128xf32>
    %44 = vector.broadcast %31 : vector<1x128xf32> to vector<8x128xf32>
    %45 = arith.mulf %43, %44 : vector<8x128xf32>
    %46 = vector.broadcast %34 : vector<1x128xf32> to vector<8x128xf32>
    %47 = arith.addf %45, %46 : vector<8x128xf32>
    %48 = vector.extract_strided_slice %47 {offsets = [0, 0], sizes = [8, 32], strides = [1, 1]} : vector<8x128xf32> to vector<8x32xf32>
    %49 = vector.extract_strided_slice %47 {offsets = [0, 32], sizes = [8, 32], strides = [1, 1]} : vector<8x128xf32> to vector<8x32xf32>
    %50 = vector.extract_strided_slice %47 {offsets = [0, 64], sizes = [8, 32], strides = [1, 1]} : vector<8x128xf32> to vector<8x32xf32>
    %51 = vector.extract_strided_slice %47 {offsets = [0, 96], sizes = [8, 32], strides = [1, 1]} : vector<8x128xf32> to vector<8x32xf32>
    %52 = arith.mulf %49, %36 : vector<8x32xf32>
    %53 = arith.mulf %48, %50 : vector<8x32xf32>
    %54 = arith.addf %52, %53 : vector<8x32xf32>
    %55 = math.tanh %54 : vector<8x32xf32>
    %56 = arith.mulf %51, %55 : vector<8x32xf32>
    %57 = vector.extract_strided_slice %22 {offsets = [8, 0], sizes = [8, 128], strides = [1, 1]} : vector<64x128xf32> to vector<8x128xf32>
    %c0_19 = arith.constant 0 : index
    %c0_20 = arith.constant 0 : index
    %58 = vector.load %arg4[%c0_19, %c0_20] : memref<32x128xf32, #tpu.memory_space<vmem>>, vector<32x128xf32>
    %cst_21 = arith.constant dense<0.000000e+00> : vector<8x128xf32>
    %59 = tpu.matmul %56, %58, %cst_21 {dimension_numbers = #tpu.dot_dimension_numbers<[1], [0], [0], [1], [0, 0, 1, 1], [], []>} : vector<8x32xf32>, vector<32x128xf32>, vector<8x128xf32> -> vector<8x128xf32>
    %60 = arith.addf %57, %59 : vector<8x128xf32>
    %61 = vector.broadcast %31 : vector<1x128xf32> to vector<8x128xf32>
    %62 = arith.mulf %60, %61 : vector<8x128xf32>
    %63 = math.tanh %62 : vector<8x128xf32>
    %64 = vector.broadcast %31 : vector<1x128xf32> to vector<8x128xf32>
    %65 = arith.mulf %63, %64 : vector<8x128xf32>
    %66 = vector.broadcast %34 : vector<1x128xf32> to vector<8x128xf32>
    %67 = arith.addf %65, %66 : vector<8x128xf32>
    %68 = vector.extract_strided_slice %67 {offsets = [0, 0], sizes = [8, 32], strides = [1, 1]} : vector<8x128xf32> to vector<8x32xf32>
    %69 = vector.extract_strided_slice %67 {offsets = [0, 32], sizes = [8, 32], strides = [1, 1]} : vector<8x128xf32> to vector<8x32xf32>
    %70 = vector.extract_strided_slice %67 {offsets = [0, 64], sizes = [8, 32], strides = [1, 1]} : vector<8x128xf32> to vector<8x32xf32>
    %71 = vector.extract_strided_slice %67 {offsets = [0, 96], sizes = [8, 32], strides = [1, 1]} : vector<8x128xf32> to vector<8x32xf32>
    %72 = arith.mulf %69, %54 : vector<8x32xf32>
    %73 = arith.mulf %68, %70 : vector<8x32xf32>
    %74 = arith.addf %72, %73 : vector<8x32xf32>
    %75 = math.tanh %74 : vector<8x32xf32>
    %76 = arith.mulf %71, %75 : vector<8x32xf32>
    %77 = vector.extract_strided_slice %22 {offsets = [16, 0], sizes = [8, 128], strides = [1, 1]} : vector<64x128xf32> to vector<8x128xf32>
    %c0_22 = arith.constant 0 : index
    %c0_23 = arith.constant 0 : index
    %78 = vector.load %arg4[%c0_22, %c0_23] : memref<32x128xf32, #tpu.memory_space<vmem>>, vector<32x128xf32>
    %cst_24 = arith.constant dense<0.000000e+00> : vector<8x128xf32>
    %79 = tpu.matmul %76, %78, %cst_24 {dimension_numbers = #tpu.dot_dimension_numbers<[1], [0], [0], [1], [0, 0, 1, 1], [], []>} : vector<8x32xf32>, vector<32x128xf32>, vector<8x128xf32> -> vector<8x128xf32>
    %80 = arith.addf %77, %79 : vector<8x128xf32>
    %81 = vector.broadcast %31 : vector<1x128xf32> to vector<8x128xf32>
    %82 = arith.mulf %80, %81 : vector<8x128xf32>
    %83 = math.tanh %82 : vector<8x128xf32>
    %84 = vector.broadcast %31 : vector<1x128xf32> to vector<8x128xf32>
    %85 = arith.mulf %83, %84 : vector<8x128xf32>
    %86 = vector.broadcast %34 : vector<1x128xf32> to vector<8x128xf32>
    %87 = arith.addf %85, %86 : vector<8x128xf32>
    %88 = vector.extract_strided_slice %87 {offsets = [0, 0], sizes = [8, 32], strides = [1, 1]} : vector<8x128xf32> to vector<8x32xf32>
    %89 = vector.extract_strided_slice %87 {offsets = [0, 32], sizes = [8, 32], strides = [1, 1]} : vector<8x128xf32> to vector<8x32xf32>
    %90 = vector.extract_strided_slice %87 {offsets = [0, 64], sizes = [8, 32], strides = [1, 1]} : vector<8x128xf32> to vector<8x32xf32>
    %91 = vector.extract_strided_slice %87 {offsets = [0, 96], sizes = [8, 32], strides = [1, 1]} : vector<8x128xf32> to vector<8x32xf32>
    %92 = arith.mulf %89, %74 : vector<8x32xf32>
    %93 = arith.mulf %88, %90 : vector<8x32xf32>
    %94 = arith.addf %92, %93 : vector<8x32xf32>
    %95 = math.tanh %94 : vector<8x32xf32>
    %96 = arith.mulf %91, %95 : vector<8x32xf32>
    %97 = vector.extract_strided_slice %22 {offsets = [24, 0], sizes = [8, 128], strides = [1, 1]} : vector<64x128xf32> to vector<8x128xf32>
    %c0_25 = arith.constant 0 : index
    %c0_26 = arith.constant 0 : index
    %98 = vector.load %arg4[%c0_25, %c0_26] : memref<32x128xf32, #tpu.memory_space<vmem>>, vector<32x128xf32>
    %cst_27 = arith.constant dense<0.000000e+00> : vector<8x128xf32>
    %99 = tpu.matmul %96, %98, %cst_27 {dimension_numbers = #tpu.dot_dimension_numbers<[1], [0], [0], [1], [0, 0, 1, 1], [], []>} : vector<8x32xf32>, vector<32x128xf32>, vector<8x128xf32> -> vector<8x128xf32>
    %100 = arith.addf %97, %99 : vector<8x128xf32>
    %101 = vector.broadcast %31 : vector<1x128xf32> to vector<8x128xf32>
    %102 = arith.mulf %100, %101 : vector<8x128xf32>
    %103 = math.tanh %102 : vector<8x128xf32>
    %104 = vector.broadcast %31 : vector<1x128xf32> to vector<8x128xf32>
    %105 = arith.mulf %103, %104 : vector<8x128xf32>
    %106 = vector.broadcast %34 : vector<1x128xf32> to vector<8x128xf32>
    %107 = arith.addf %105, %106 : vector<8x128xf32>
    %108 = vector.extract_strided_slice %107 {offsets = [0, 0], sizes = [8, 32], strides = [1, 1]} : vector<8x128xf32> to vector<8x32xf32>
    %109 = vector.extract_strided_slice %107 {offsets = [0, 32], sizes = [8, 32], strides = [1, 1]} : vector<8x128xf32> to vector<8x32xf32>
    %110 = vector.extract_strided_slice %107 {offsets = [0, 64], sizes = [8, 32], strides = [1, 1]} : vector<8x128xf32> to vector<8x32xf32>
    %111 = vector.extract_strided_slice %107 {offsets = [0, 96], sizes = [8, 32], strides = [1, 1]} : vector<8x128xf32> to vector<8x32xf32>
    %112 = arith.mulf %109, %94 : vector<8x32xf32>
    %113 = arith.mulf %108, %110 : vector<8x32xf32>
    %114 = arith.addf %112, %113 : vector<8x32xf32>
    %115 = math.tanh %114 : vector<8x32xf32>
    %116 = arith.mulf %111, %115 : vector<8x32xf32>
    %117 = vector.extract_strided_slice %22 {offsets = [32, 0], sizes = [8, 128], strides = [1, 1]} : vector<64x128xf32> to vector<8x128xf32>
    %c0_28 = arith.constant 0 : index
    %c0_29 = arith.constant 0 : index
    %118 = vector.load %arg4[%c0_28, %c0_29] : memref<32x128xf32, #tpu.memory_space<vmem>>, vector<32x128xf32>
    %cst_30 = arith.constant dense<0.000000e+00> : vector<8x128xf32>
    %119 = tpu.matmul %116, %118, %cst_30 {dimension_numbers = #tpu.dot_dimension_numbers<[1], [0], [0], [1], [0, 0, 1, 1], [], []>} : vector<8x32xf32>, vector<32x128xf32>, vector<8x128xf32> -> vector<8x128xf32>
    %120 = arith.addf %117, %119 : vector<8x128xf32>
    %121 = vector.broadcast %31 : vector<1x128xf32> to vector<8x128xf32>
    %122 = arith.mulf %120, %121 : vector<8x128xf32>
    %123 = math.tanh %122 : vector<8x128xf32>
    %124 = vector.broadcast %31 : vector<1x128xf32> to vector<8x128xf32>
    %125 = arith.mulf %123, %124 : vector<8x128xf32>
    %126 = vector.broadcast %34 : vector<1x128xf32> to vector<8x128xf32>
    %127 = arith.addf %125, %126 : vector<8x128xf32>
    %128 = vector.extract_strided_slice %127 {offsets = [0, 0], sizes = [8, 32], strides = [1, 1]} : vector<8x128xf32> to vector<8x32xf32>
    %129 = vector.extract_strided_slice %127 {offsets = [0, 32], sizes = [8, 32], strides = [1, 1]} : vector<8x128xf32> to vector<8x32xf32>
    %130 = vector.extract_strided_slice %127 {offsets = [0, 64], sizes = [8, 32], strides = [1, 1]} : vector<8x128xf32> to vector<8x32xf32>
    %131 = vector.extract_strided_slice %127 {offsets = [0, 96], sizes = [8, 32], strides = [1, 1]} : vector<8x128xf32> to vector<8x32xf32>
    %132 = arith.mulf %129, %114 : vector<8x32xf32>
    %133 = arith.mulf %128, %130 : vector<8x32xf32>
    %134 = arith.addf %132, %133 : vector<8x32xf32>
    %135 = math.tanh %134 : vector<8x32xf32>
    %136 = arith.mulf %131, %135 : vector<8x32xf32>
    %137 = vector.extract_strided_slice %22 {offsets = [40, 0], sizes = [8, 128], strides = [1, 1]} : vector<64x128xf32> to vector<8x128xf32>
    %c0_31 = arith.constant 0 : index
    %c0_32 = arith.constant 0 : index
    %138 = vector.load %arg4[%c0_31, %c0_32] : memref<32x128xf32, #tpu.memory_space<vmem>>, vector<32x128xf32>
    %cst_33 = arith.constant dense<0.000000e+00> : vector<8x128xf32>
    %139 = tpu.matmul %136, %138, %cst_33 {dimension_numbers = #tpu.dot_dimension_numbers<[1], [0], [0], [1], [0, 0, 1, 1], [], []>} : vector<8x32xf32>, vector<32x128xf32>, vector<8x128xf32> -> vector<8x128xf32>
    %140 = arith.addf %137, %139 : vector<8x128xf32>
    %141 = vector.broadcast %31 : vector<1x128xf32> to vector<8x128xf32>
    %142 = arith.mulf %140, %141 : vector<8x128xf32>
    %143 = math.tanh %142 : vector<8x128xf32>
    %144 = vector.broadcast %31 : vector<1x128xf32> to vector<8x128xf32>
    %145 = arith.mulf %143, %144 : vector<8x128xf32>
    %146 = vector.broadcast %34 : vector<1x128xf32> to vector<8x128xf32>
    %147 = arith.addf %145, %146 : vector<8x128xf32>
    %148 = vector.extract_strided_slice %147 {offsets = [0, 0], sizes = [8, 32], strides = [1, 1]} : vector<8x128xf32> to vector<8x32xf32>
    %149 = vector.extract_strided_slice %147 {offsets = [0, 32], sizes = [8, 32], strides = [1, 1]} : vector<8x128xf32> to vector<8x32xf32>
    %150 = vector.extract_strided_slice %147 {offsets = [0, 64], sizes = [8, 32], strides = [1, 1]} : vector<8x128xf32> to vector<8x32xf32>
    %151 = vector.extract_strided_slice %147 {offsets = [0, 96], sizes = [8, 32], strides = [1, 1]} : vector<8x128xf32> to vector<8x32xf32>
    %152 = arith.mulf %149, %134 : vector<8x32xf32>
    %153 = arith.mulf %148, %150 : vector<8x32xf32>
    %154 = arith.addf %152, %153 : vector<8x32xf32>
    %155 = math.tanh %154 : vector<8x32xf32>
    %156 = arith.mulf %151, %155 : vector<8x32xf32>
    %157 = vector.extract_strided_slice %22 {offsets = [48, 0], sizes = [8, 128], strides = [1, 1]} : vector<64x128xf32> to vector<8x128xf32>
    %c0_34 = arith.constant 0 : index
    %c0_35 = arith.constant 0 : index
    %158 = vector.load %arg4[%c0_34, %c0_35] : memref<32x128xf32, #tpu.memory_space<vmem>>, vector<32x128xf32>
    %cst_36 = arith.constant dense<0.000000e+00> : vector<8x128xf32>
    %159 = tpu.matmul %156, %158, %cst_36 {dimension_numbers = #tpu.dot_dimension_numbers<[1], [0], [0], [1], [0, 0, 1, 1], [], []>} : vector<8x32xf32>, vector<32x128xf32>, vector<8x128xf32> -> vector<8x128xf32>
    %160 = arith.addf %157, %159 : vector<8x128xf32>
    %161 = vector.broadcast %31 : vector<1x128xf32> to vector<8x128xf32>
    %162 = arith.mulf %160, %161 : vector<8x128xf32>
    %163 = math.tanh %162 : vector<8x128xf32>
    %164 = vector.broadcast %31 : vector<1x128xf32> to vector<8x128xf32>
    %165 = arith.mulf %163, %164 : vector<8x128xf32>
    %166 = vector.broadcast %34 : vector<1x128xf32> to vector<8x128xf32>
    %167 = arith.addf %165, %166 : vector<8x128xf32>
    %168 = vector.extract_strided_slice %167 {offsets = [0, 0], sizes = [8, 32], strides = [1, 1]} : vector<8x128xf32> to vector<8x32xf32>
    %169 = vector.extract_strided_slice %167 {offsets = [0, 32], sizes = [8, 32], strides = [1, 1]} : vector<8x128xf32> to vector<8x32xf32>
    %170 = vector.extract_strided_slice %167 {offsets = [0, 64], sizes = [8, 32], strides = [1, 1]} : vector<8x128xf32> to vector<8x32xf32>
    %171 = vector.extract_strided_slice %167 {offsets = [0, 96], sizes = [8, 32], strides = [1, 1]} : vector<8x128xf32> to vector<8x32xf32>
    %172 = arith.mulf %169, %154 : vector<8x32xf32>
    %173 = arith.mulf %168, %170 : vector<8x32xf32>
    %174 = arith.addf %172, %173 : vector<8x32xf32>
    %175 = math.tanh %174 : vector<8x32xf32>
    %176 = arith.mulf %171, %175 : vector<8x32xf32>
    %177 = vector.extract_strided_slice %22 {offsets = [56, 0], sizes = [8, 128], strides = [1, 1]} : vector<64x128xf32> to vector<8x128xf32>
    %c0_37 = arith.constant 0 : index
    %c0_38 = arith.constant 0 : index
    %178 = vector.load %arg4[%c0_37, %c0_38] : memref<32x128xf32, #tpu.memory_space<vmem>>, vector<32x128xf32>
    %cst_39 = arith.constant dense<0.000000e+00> : vector<8x128xf32>
    %179 = tpu.matmul %176, %178, %cst_39 {dimension_numbers = #tpu.dot_dimension_numbers<[1], [0], [0], [1], [0, 0, 1, 1], [], []>} : vector<8x32xf32>, vector<32x128xf32>, vector<8x128xf32> -> vector<8x128xf32>
    %180 = arith.addf %177, %179 : vector<8x128xf32>
    %181 = vector.broadcast %31 : vector<1x128xf32> to vector<8x128xf32>
    %182 = arith.mulf %180, %181 : vector<8x128xf32>
    %183 = math.tanh %182 : vector<8x128xf32>
    %184 = vector.broadcast %31 : vector<1x128xf32> to vector<8x128xf32>
    %185 = arith.mulf %183, %184 : vector<8x128xf32>
    %186 = vector.broadcast %34 : vector<1x128xf32> to vector<8x128xf32>
    %187 = arith.addf %185, %186 : vector<8x128xf32>
    %188 = vector.extract_strided_slice %187 {offsets = [0, 0], sizes = [8, 32], strides = [1, 1]} : vector<8x128xf32> to vector<8x32xf32>
    %189 = vector.extract_strided_slice %187 {offsets = [0, 32], sizes = [8, 32], strides = [1, 1]} : vector<8x128xf32> to vector<8x32xf32>
    %190 = vector.extract_strided_slice %187 {offsets = [0, 64], sizes = [8, 32], strides = [1, 1]} : vector<8x128xf32> to vector<8x32xf32>
    %191 = vector.extract_strided_slice %187 {offsets = [0, 96], sizes = [8, 32], strides = [1, 1]} : vector<8x128xf32> to vector<8x32xf32>
    %192 = arith.mulf %189, %174 : vector<8x32xf32>
    %193 = arith.mulf %188, %190 : vector<8x32xf32>
    %194 = arith.addf %192, %193 : vector<8x32xf32>
    %195 = math.tanh %194 : vector<8x32xf32>
    %196 = arith.mulf %191, %195 : vector<8x32xf32>
    %197 = tpu.concatenate %56, %76, %96, %116, %136, %156, %176, %196 in 0 : vector<8x32xf32>, vector<8x32xf32>, vector<8x32xf32>, vector<8x32xf32>, vector<8x32xf32>, vector<8x32xf32>, vector<8x32xf32>, vector<8x32xf32> -> vector<64x32xf32>
    %c0_40 = arith.constant 0 : index
    %c0_41 = arith.constant 0 : index
    %198 = vector.load %arg6[%c0_40, %c0_41] : memref<64x32xf32, #tpu.memory_space<vmem>>, vector<64x32xf32>
    tpu.vector_store %arg6[%c0_40, %c0_41], %197 {strides = array<i32>} : memref<64x32xf32, #tpu.memory_space<vmem>>, vector<64x32xf32>,
    return
  }
}

</mosaic_0001>

<llo_original>
// kernel: tpu_custom_call.1
$region0: #{tpu_custom_call.1}
  #allocation0 [shape = 'u32[]', space=smem, size = 0x4, offset = 0x4, fixed_abs, tag = 'smem constant byte address 0x4 - core index']
  #allocation1 [shape = 'u32[144,128]{1,0:T(1,128)}', space=vmem, size = 0x12000, scoped, tag = 'internal scratch']
  %s0 = inlined_call_operand.vmem [shape: s32[64,1], index: 0, kind: input, shape index: {}]
  %s1 = inlined_call_operand.vmem [shape: s32[64,1], index: 1, kind: input, shape index: {}]
  %s2 = inlined_call_operand.vmem [shape: f32[128,32], index: 2, kind: input, shape index: {}]
  %s3 = inlined_call_operand.vmem [shape: f32[32,128], index: 3, kind: input, shape index: {}]
  %s4 = inlined_call_operand.vmem [shape: f32[32,128], index: 4, kind: input, shape index: {}]
  %s5 = inlined_call_operand.vmem [shape: f32[1,128], index: 5, kind: input, shape index: {}]
  %s6 = inlined_call_operand.vmem [shape: f32[64,32], index: 6, kind: output, shape index: {}]
  %s7 = sld [smem:[#allocation0]]
  $region34: #{tpu_custom_call.1} parent=0
    _
  %s9 = ssub.s32 1, %s7
  %s10 = scalar_select 0, %s9, %s7
  // Predicated region
  $region2: #{tpu_custom_call.1} parent=0 // pred_check
    _
  $region3: #{tpu_custom_call.1} parent=0 // pred_check_branch
    %12 = sbr.rel (0) target = $region5
  $region4: #{tpu_custom_call.1} parent=0 // pred_region
    _
  $region5: #{tpu_custom_call.1} parent=0 // pred_fallthru
    _
  // Predicated region
  $region6: #{tpu_custom_call.1} parent=0 // pred_check
    _
  $region7: #{tpu_custom_call.1} parent=0 // pred_check_branch
    %14 = sbr.rel (0) target = $region9
  $region8: #{tpu_custom_call.1} parent=0 // pred_region
    _
  $region9: #{tpu_custom_call.1} parent=0 // pred_fallthru
    _
  // Predicated region
  $region10: #{tpu_custom_call.1} parent=0 // pred_check
    _
  $region11: #{tpu_custom_call.1} parent=0 // pred_check_branch
    %16 = sbr.rel (0) target = $region13
  $region12: #{tpu_custom_call.1} parent=0 // pred_region
    _
  $region13: #{tpu_custom_call.1} parent=0 // pred_fallthru
    _
  // Predicated region
  $region14: #{tpu_custom_call.1} parent=0 // pred_check
    _
  $region15: #{tpu_custom_call.1} parent=0 // pred_check_branch
    %18 = sbr.rel (0) target = $region17
  $region16: #{tpu_custom_call.1} parent=0 // pred_region
    _
  $region17: #{tpu_custom_call.1} parent=0 // pred_fallthru
    _
  // Predicated region
  $region18: #{tpu_custom_call.1} parent=0 // pred_check
    _
  $region19: #{tpu_custom_call.1} parent=0 // pred_check_branch
    %20 = sbr.rel (0) target = $region21
  $region20: #{tpu_custom_call.1} parent=0 // pred_region
    _
  $region21: #{tpu_custom_call.1} parent=0 // pred_fallthru
    _
  // Predicated region
  $region22: #{tpu_custom_call.1} parent=0 // pred_check
    _
  $region23: #{tpu_custom_call.1} parent=0 // pred_check_branch
    %22 = sbr.rel (0) target = $region25
  $region24: #{tpu_custom_call.1} parent=0 // pred_region
    _
  $region25: #{tpu_custom_call.1} parent=0 // pred_fallthru
    _
  %v23 = vlaneseq
  %v24 = vand.u32 %v23, 127
  %v25 = vld [vmem:[%s0] sm:$0xff]
  %v26 = vld [vmem:[%s0 + $0x8] sm:$0xff]
  %v27 = vld [vmem:[%s0 + $0x10] sm:$0xff]
  %v28 = vld [vmem:[%s0 + $0x18] sm:$0xff]
  %v29 = vld [vmem:[%s0 + $0x20] sm:$0xff]
  %v30 = vld [vmem:[%s0 + $0x28] sm:$0xff]
  %v31 = vld [vmem:[%s0 + $0x30] sm:$0xff]
  %v32 = vld [vmem:[%s0 + $0x38] sm:$0xff]
  %33 = vset.pattern.permute.xlu0 0
  %34 = vperm.xlu0 %33, %v25
  %v35 = vpop.permute.xlu0 %34
  %36 = vset.pattern.permute.xlu0 0
  %37 = vperm.xlu0 %36, %v26
  %v38 = vpop.permute.xlu0 %37
  %39 = vset.pattern.permute.xlu0 0
  %40 = vperm.xlu0 %39, %v27
  %v41 = vpop.permute.xlu0 %40
  %42 = vset.pattern.permute.xlu0 0
  %43 = vperm.xlu0 %42, %v28
  %v44 = vpop.permute.xlu0 %43
  %45 = vset.pattern.permute.xlu0 0
  %46 = vperm.xlu0 %45, %v29
  %v47 = vpop.permute.xlu0 %46
  %48 = vset.pattern.permute.xlu0 0
  %49 = vperm.xlu0 %48, %v30
  %v50 = vpop.permute.xlu0 %49
  %51 = vset.pattern.permute.xlu0 0
  %52 = vperm.xlu0 %51, %v31
  %v53 = vpop.permute.xlu0 %52
  %54 = vset.pattern.permute.xlu0 0
  %55 = vperm.xlu0 %54, %v32
  %v56 = vpop.permute.xlu0 %55
  %vm57 = vcmp.eq.s32.totalorder %v24, %v35
  %vm58 = vcmp.eq.s32.totalorder %v24, %v38
  %vm59 = vcmp.eq.s32.totalorder %v24, %v41
  %vm60 = vcmp.eq.s32.totalorder %v24, %v44
  %vm61 = vcmp.eq.s32.totalorder %v24, %v47
  %vm62 = vcmp.eq.s32.totalorder %v24, %v50
  %vm63 = vcmp.eq.s32.totalorder %v24, %v53
  %vm64 = vcmp.eq.s32.totalorder %v24, %v56
  %v65 = vld [vmem:[%s1] sm:$0xff]
  %v66 = vld [vmem:[%s1 + $0x8] sm:$0xff]
  %v67 = vld [vmem:[%s1 + $0x10] sm:$0xff]
  %v68 = vld [vmem:[%s1 + $0x18] sm:$0xff]
  %v69 = vld [vmem:[%s1 + $0x20] sm:$0xff]
  %v70 = vld [vmem:[%s1 + $0x28] sm:$0xff]
  %v71 = vld [vmem:[%s1 + $0x30] sm:$0xff]
  %v72 = vld [vmem:[%s1 + $0x38] sm:$0xff]
  %v73 = vadd.s32 %v65, 50
  %v74 = vadd.s32 %v66, 50
  %v75 = vadd.s32 %v67, 50
  %v76 = vadd.s32 %v68, 50
  %v77 = vadd.s32 %v69, 50
  %v78 = vadd.s32 %v70, 50
  %v79 = vadd.s32 %v71, 50
  %v80 = vadd.s32 %v72, 50
  %81 = vset.pattern.permute.xlu0 0
  %82 = vperm.xlu0 %81, %v73
  %v83 = vpop.permute.xlu0 %82
  %84 = vset.pattern.permute.xlu0 0
  %85 = vperm.xlu0 %84, %v74
  %v86 = vpop.permute.xlu0 %85
  %87 = vset.pattern.permute.xlu0 0
  %88 = vperm.xlu0 %87, %v75
  %v89 = vpop.permute.xlu0 %88
  %90 = vset.pattern.permute.xlu0 0
  %91 = vperm.xlu0 %90, %v76
  %v92 = vpop.permute.xlu0 %91
  %93 = vset.pattern.permute.xlu0 0
  %94 = vperm.xlu0 %93, %v77
  %v95 = vpop.permute.xlu0 %94
  %96 = vset.pattern.permute.xlu0 0
  %97 = vperm.xlu0 %96, %v78
  %v98 = vpop.permute.xlu0 %97
  %99 = vset.pattern.permute.xlu0 0
  %100 = vperm.xlu0 %99, %v79
  %v101 = vpop.permute.xlu0 %100
  %102 = vset.pattern.permute.xlu0 0
  %103 = vperm.xlu0 %102, %v80
  %v104 = vpop.permute.xlu0 %103
  %vm105 = vcmp.eq.s32.totalorder %v24, %v83
  %vm106 = vcmp.eq.s32.totalorder %v24, %v86
  %vm107 = vcmp.eq.s32.totalorder %v24, %v89
  %vm108 = vcmp.eq.s32.totalorder %v24, %v92
  %vm109 = vcmp.eq.s32.totalorder %v24, %v95
  %vm110 = vcmp.eq.s32.totalorder %v24, %v98
  %vm111 = vcmp.eq.s32.totalorder %v24, %v101
  %vm112 = vcmp.eq.s32.totalorder %v24, %v104
  %vm113 = vmor %vm57, %vm105
  %vm114 = vmor %vm58, %vm106
  %vm115 = vmor %vm59, %vm107
  %vm116 = vmor %vm60, %vm108
  %vm117 = vmor %vm61, %vm109
  %vm118 = vmor %vm62, %vm110
  %vm119 = vmor %vm63, %vm111
  %vm120 = vmor %vm64, %vm112
  %vm121 = vcmp.eq.s32.totalorder %v24, 70
  %vm122 = vmor %vm113, %vm121
  %vm123 = vmor %vm114, %vm121
  %vm124 = vmor %vm115, %vm121
  %vm125 = vmor %vm116, %vm121
  %vm126 = vmor %vm117, %vm121
  %vm127 = vmor %vm118, %vm121
  %vm128 = vmor %vm119, %vm121
  %vm129 = vmor %vm120, %vm121
  %v130 = vsel %vm122, 1, 0
  %v131 = vsel %vm123, 1, 0
  %v132 = vsel %vm124, 1, 0
  %v133 = vsel %vm125, 1, 0
  %v134 = vsel %vm126, 1, 0
  %v135 = vsel %vm127, 1, 0
  %v136 = vsel %vm128, 1, 0
  %v137 = vsel %vm129, 1, 0
  %v138 = vcvt.s32.f32 %v130
  %v139 = vcvt.s32.f32 %v131
  %v140 = vcvt.s32.f32 %v132
  %v141 = vcvt.s32.f32 %v133
  %v142 = vcvt.s32.f32 %v134
  %v143 = vcvt.s32.f32 %v135
  %v144 = vcvt.s32.f32 %v136
  %v145 = vcvt.s32.f32 %v137
  %v146 = vld [vmem:[%s2] sm:$0xff]
  %v147 = vld [vmem:[%s2 + $0x8] sm:$0xff]
  %v148 = vld [vmem:[%s2 + $0x10] sm:$0xff]
  %v149 = vld [vmem:[%s2 + $0x18] sm:$0xff]
  %v150 = vld [vmem:[%s2 + $0x20] sm:$0xff]
  %v151 = vld [vmem:[%s2 + $0x28] sm:$0xff]
  %v152 = vld [vmem:[%s2 + $0x30] sm:$0xff]
  %v153 = vld [vmem:[%s2 + $0x38] sm:$0xff]
  %v154 = vld [vmem:[%s2 + $0x40] sm:$0xff]
  %v155 = vld [vmem:[%s2 + $0x48] sm:$0xff]
  %v156 = vld [vmem:[%s2 + $0x50] sm:$0xff]
  %v157 = vld [vmem:[%s2 + $0x58] sm:$0xff]
  %v158 = vld [vmem:[%s2 + $0x60] sm:$0xff]
  %v159 = vld [vmem:[%s2 + $0x68] sm:$0xff]
  %v160 = vld [vmem:[%s2 + $0x70] sm:$0xff]
  %v161 = vld [vmem:[%s2 + $0x78] sm:$0xff]
  %162 = vmatprep.subr.mxu0 0.0
  %163 = vmatpush1.msra.mxu0 %v161
  %164 = vmatprep.subr.mxu0 0.0
  %165 = vmatpush1.msra.mxu0 %v160
  %166 = vmatprep.subr.mxu0 0.0
  %167 = vmatpush1.msra.mxu0 %v159
  %168 = vmatprep.subr.mxu0 0.0
  %169 = vmatpush1.msra.mxu0 %v158
  %170 = vmatprep.subr.mxu0 0.0
  %171 = vmatpush1.msra.mxu0 %v157
  %172 = vmatprep.subr.mxu0 0.0
  %173 = vmatpush1.msra.mxu0 %v156
  %174 = vmatprep.subr.mxu0 0.0
  %175 = vmatpush1.msra.mxu0 %v155
  %176 = vmatprep.subr.mxu0 0.0
  %177 = vmatpush1.msra.mxu0 %v154
  %178 = vmatprep.subr.mxu0 0.0
  %179 = vmatpush1.msra.mxu0 %v153
  %180 = vmatprep.subr.mxu0 0.0
  %181 = vmatpush1.msra.mxu0 %v152
  %182 = vmatprep.subr.mxu0 0.0
  %183 = vmatpush1.msra.mxu0 %v151
  %184 = vmatprep.subr.mxu0 0.0
  %185 = vmatpush1.msra.mxu0 %v150
  %186 = vmatprep.subr.mxu0 0.0
  %187 = vmatpush1.msra.mxu0 %v149
  %188 = vmatprep.subr.mxu0 0.0
  %189 = vmatpush1.msra.mxu0 %v148
  %190 = vmatprep.subr.mxu0 0.0
  %191 = vmatpush1.msra.mxu0 %v147
  %192 = vmatprep.subr.mxu0 0.0
  %193 = vmatpush1.msra.mxu0 %v146
  %194 = vmatprep.subr.mxu0 0.0
  %195 = vmatpush2.msra.mxu0 0.0
  %196 = vmatprep.subr.mxu0 0.0
  %197 = vmatpush2.msra.mxu0 0.0
  %198 = vmatprep.subr.mxu0 0.0
  %199 = vmatpush2.msra.mxu0 0.0
  %200 = vmatprep.subr.mxu0 0.0
  %201 = vmatpush2.msra.mxu0 0.0
  %202 = vmatprep.subr.mxu0 0.0
  %203 = vmatpush2.msra.mxu0 0.0
  %204 = vmatprep.subr.mxu0 0.0
  %205 = vmatpush2.msra.mxu0 0.0
  %206 = vmatprep.subr.mxu0 0.0
  %207 = vmatpush2.msra.mxu0 0.0
  %208 = vmatprep.subr.mxu0 0.0
  %209 = vmatpush2.msra.mxu0 0.0
  %210 = vmatprep.subr.mxu0 0.0
  %211 = vmatpush2.msra.mxu0 0.0
  %212 = vmatprep.subr.mxu0 0.0
  %213 = vmatpush2.msra.mxu0 0.0
  %214 = vmatprep.subr.mxu0 0.0
  %215 = vmatpush2.msra.mxu0 0.0
  %216 = vmatprep.subr.mxu0 0.0
  %217 = vmatpush2.msra.mxu0 0.0
  %218 = vmatprep.subr.mxu0 0.0
  %219 = vmatpush2.msra.mxu0 0.0
  %220 = vmatprep.subr.mxu0 0.0
  %221 = vmatpush2.msra.mxu0 0.0
  %222 = vmatprep.subr.mxu0 0.0
  %223 = vmatpush2.msra.mxu0 0.0
  %224 = vmatprep.subr.mxu0 0.0
  %225 = vmatpush2.msra.mxu0 0.0
  %226 = vmatprep.mubr.f32.mxu0 0.0
  %227 = vmatmul.mubr.f32.gmra.mxu0 %v138
  %v228 = vpop.f32.mrf.mxu0
  %v229 = vadd.f32 0.0, %v228
  %v230 = vpop.f32.mrf.mxu0
  %231 = vmatprep.mubr.f32.mxu0 0.0
  %232 = vmatmul.mubr.f32.gmra.mxu0 %v139
  %v233 = vpop.f32.mrf.mxu0
  %v234 = vadd.f32 0.0, %v233
  %v235 = vpop.f32.mrf.mxu0
  %236 = vmatprep.mubr.f32.mxu0 0.0
  %237 = vmatmul.mubr.f32.gmra.mxu0 %v140
  %v238 = vpop.f32.mrf.mxu0
  %v239 = vadd.f32 0.0, %v238
  %v240 = vpop.f32.mrf.mxu0
  %241 = vmatprep.mubr.f32.mxu0 0.0
  %242 = vmatmul.mubr.f32.gmra.mxu0 %v141
  %v243 = vpop.f32.mrf.mxu0
  %v244 = vadd.f32 0.0, %v243
  %v245 = vpop.f32.mrf.mxu0
  %246 = vmatprep.mubr.f32.mxu0 0.0
  %247 = vmatmul.mubr.f32.gmra.mxu0 %v142
  %v248 = vpop.f32.mrf.mxu0
  %v249 = vadd.f32 0.0, %v248
  %v250 = vpop.f32.mrf.mxu0
  %251 = vmatprep.mubr.f32.mxu0 0.0
  %252 = vmatmul.mubr.f32.gmra.mxu0 %v143
  %v253 = vpop.f32.mrf.mxu0
  %v254 = vadd.f32 0.0, %v253
  %v255 = vpop.f32.mrf.mxu0
  %256 = vmatprep.mubr.f32.mxu0 0.0
  %257 = vmatmul.mubr.f32.gmra.mxu0 %v144
  %v258 = vpop.f32.mrf.mxu0
  %v259 = vadd.f32 0.0, %v258
  %v260 = vpop.f32.mrf.mxu0
  %261 = vmatprep.mubr.f32.mxu0 0.0
  %262 = vmatmul.mubr.f32.gmra.mxu0 %v145
  %v263 = vpop.f32.mrf.mxu0
  %v264 = vadd.f32 0.0, %v263
  %v265 = vpop.f32.mrf.mxu0
  %266 = vdwg.mxu0
  %v267 = vtanh.pop %v229
  %v268 = vtanh.pop %v234
  %v269 = vtanh.pop %v239
  %v270 = vtanh.pop %v244
  %v271 = vtanh.pop %v249
  %v272 = vtanh.pop %v254
  %v273 = vtanh.pop %v259
  %v274 = vtanh.pop %v264
  %v275 = vld [vmem:[%s3] sm:$0xff]
  %v276 = vld [vmem:[%s3 + $0x8] sm:$0xff]
  %v277 = vld [vmem:[%s3 + $0x10] sm:$0xff]
  %v278 = vld [vmem:[%s3 + $0x18] sm:$0xff]
  %v279 = vld [vmem:[%s5] sm:$0x1]
  %v281 = vlaneseq
  %v282 = vshrl.u32 %v281, 7
  %v283 = vsub.s32 0, %v282
  %v284 = vrot.slane %v279, %v283
  %vm286 = vcmask 261120
  %v288 = vsel %vm286, %v267, 0
  %v291 = vsel %vm286, %v268, 0
  %v294 = vsel %vm286, %v269, 0
  %v297 = vsel %vm286, %v270, 0
  %v300 = vsel %vm286, %v271, 0
  %v303 = vsel %vm286, %v272, 0
  %v306 = vsel %vm286, %v273, 0
  %v309 = vsel %vm286, %v274, 0
  %311 = vmatprep.subr.mxu0 0.0
  %312 = vmatpush1.msra.mxu0 0.0
  %313 = vmatprep.subr.mxu0 0.0
  %314 = vmatpush1.msra.mxu0 0.0
  %315 = vmatprep.subr.mxu0 0.0
  %316 = vmatpush1.msra.mxu0 0.0
  %317 = vmatprep.subr.mxu0 0.0
  %318 = vmatpush1.msra.mxu0 0.0
  %319 = vmatprep.subr.mxu0 0.0
  %320 = vmatpush1.msra.mxu0 0.0
  %321 = vmatprep.subr.mxu0 0.0
  %322 = vmatpush1.msra.mxu0 0.0
  %323 = vmatprep.subr.mxu0 0.0
  %324 = vmatpush1.msra.mxu0 0.0
  %325 = vmatprep.subr.mxu0 0.0
  %326 = vmatpush1.msra.mxu0 0.0
  %327 = vmatprep.subr.mxu0 0.0
  %328 = vmatpush1.msra.mxu0 0.0
  %329 = vmatprep.subr.mxu0 0.0
  %330 = vmatpush1.msra.mxu0 0.0
  %331 = vmatprep.subr.mxu0 0.0
  %332 = vmatpush1.msra.mxu0 0.0
  %333 = vmatprep.subr.mxu0 0.0
  %334 = vmatpush1.msra.mxu0 0.0
  %335 = vmatprep.subr.mxu0 0.0
  %336 = vmatpush1.msra.mxu0 %v278
  %337 = vmatprep.subr.mxu0 0.0
  %338 = vmatpush1.msra.mxu0 %v277
  %339 = vmatprep.subr.mxu0 0.0
  %340 = vmatpush1.msra.mxu0 %v276
  %341 = vmatprep.subr.mxu0 0.0
  %342 = vmatpush1.msra.mxu0 %v275
  %343 = vmatprep.subr.mxu0 0.0
  %344 = vmatpush2.msra.mxu0 0.0
  %345 = vmatprep.subr.mxu0 0.0
  %346 = vmatpush2.msra.mxu0 0.0
  %347 = vmatprep.subr.mxu0 0.0
  %348 = vmatpush2.msra.mxu0 0.0
  %349 = vmatprep.subr.mxu0 0.0
  %350 = vmatpush2.msra.mxu0 0.0
  %351 = vmatprep.subr.mxu0 0.0
  %352 = vmatpush2.msra.mxu0 0.0
  %353 = vmatprep.subr.mxu0 0.0
  %354 = vmatpush2.msra.mxu0 0.0
  %355 = vmatprep.subr.mxu0 0.0
  %356 = vmatpush2.msra.mxu0 0.0
  %357 = vmatprep.subr.mxu0 0.0
  %358 = vmatpush2.msra.mxu0 0.0
  %359 = vmatprep.subr.mxu0 0.0
  %360 = vmatpush2.msra.mxu0 0.0
  %361 = vmatprep.subr.mxu0 0.0
  %362 = vmatpush2.msra.mxu0 0.0
  %363 = vmatprep.subr.mxu0 0.0
  %364 = vmatpush2.msra.mxu0 0.0
  %365 = vmatprep.subr.mxu0 0.0
  %366 = vmatpush2.msra.mxu0 0.0
  %367 = vmatprep.subr.mxu0 0.0
  %368 = vmatpush2.msra.mxu0 0.0
  %369 = vmatprep.subr.mxu0 0.0
  %370 = vmatpush2.msra.mxu0 0.0
  %371 = vmatprep.subr.mxu0 0.0
  %372 = vmatpush2.msra.mxu0 0.0
  %373 = vmatprep.subr.mxu0 0.0
  %374 = vmatpush2.msra.mxu0 0.0
  %375 = vmatprep.mubr.f32.mxu0 0.0
  %376 = vmatmul.mubr.f32.gmra.mxu0 %v288
  %v377 = vpop.f32.mrf.mxu0
  %v378 = vadd.f32 %v284, %v377
  %v379 = vpop.f32.mrf.mxu0
  %380 = vmatprep.mubr.f32.mxu0 0.0
  %381 = vmatmul.mubr.f32.gmra.mxu0 %v291
  %v382 = vpop.f32.mrf.mxu0
  %v383 = vadd.f32 %v284, %v382
  %v384 = vpop.f32.mrf.mxu0
  %385 = vmatprep.mubr.f32.mxu0 0.0
  %386 = vmatmul.mubr.f32.gmra.mxu0 %v294
  %v387 = vpop.f32.mrf.mxu0
  %v388 = vadd.f32 %v284, %v387
  %v389 = vpop.f32.mrf.mxu0
  %390 = vmatprep.mubr.f32.mxu0 0.0
  %391 = vmatmul.mubr.f32.gmra.mxu0 %v297
  %v392 = vpop.f32.mrf.mxu0
  %v393 = vadd.f32 %v284, %v392
  %v394 = vpop.f32.mrf.mxu0
  %395 = vmatprep.mubr.f32.mxu0 0.0
  %396 = vmatmul.mubr.f32.gmra.mxu0 %v300
  %v397 = vpop.f32.mrf.mxu0
  %v398 = vadd.f32 %v284, %v397
  %v399 = vpop.f32.mrf.mxu0
  %400 = vmatprep.mubr.f32.mxu0 0.0
  %401 = vmatmul.mubr.f32.gmra.mxu0 %v303
  %v402 = vpop.f32.mrf.mxu0
  %v403 = vadd.f32 %v284, %v402
  %v404 = vpop.f32.mrf.mxu0
  %405 = vmatprep.mubr.f32.mxu0 0.0
  %406 = vmatmul.mubr.f32.gmra.mxu0 %v306
  %v407 = vpop.f32.mrf.mxu0
  %v408 = vadd.f32 %v284, %v407
  %v409 = vpop.f32.mrf.mxu0
  %410 = vmatprep.mubr.f32.mxu0 0.0
  %411 = vmatmul.mubr.f32.gmra.mxu0 %v309
  %v412 = vpop.f32.mrf.mxu0
  %v413 = vadd.f32 %v284, %v412
  %v414 = vpop.f32.mrf.mxu0
  %415 = vdwg.mxu0
  %vm416 = vcmp.ge.s32.totalorder %v24, 64
  %vm417 = vcmp.lt.s32.totalorder %v24, 96
  %vm418 = vmand %vm416, %vm417
  %v419 = vsel %vm418, 1.0, 0.5
  %v420 = vsel %vm418, 0.0, 0.5
  %v421 = vld [vmem:[%s4] sm:$0xff]
  %v422 = vld [vmem:[%s4 + $0x8] sm:$0xff]
  %v423 = vld [vmem:[%s4 + $0x10] sm:$0xff]
  %v424 = vld [vmem:[%s4 + $0x18] sm:$0xff]
  %v426 = vsel %vm286, 0.0, 0
  %428 = vmatprep.subr.mxu0 0.0
  %429 = vmatpush1.msra.mxu0 0.0
  %430 = vmatprep.subr.mxu0 0.0
  %431 = vmatpush1.msra.mxu0 0.0
  %432 = vmatprep.subr.mxu0 0.0
  %433 = vmatpush1.msra.mxu0 0.0
  %434 = vmatprep.subr.mxu0 0.0
  %435 = vmatpush1.msra.mxu0 0.0
  %436 = vmatprep.subr.mxu0 0.0
  %437 = vmatpush1.msra.mxu0 0.0
  %438 = vmatprep.subr.mxu0 0.0
  %439 = vmatpush1.msra.mxu0 0.0
  %440 = vmatprep.subr.mxu0 0.0
  %441 = vmatpush1.msra.mxu0 0.0
  %442 = vmatprep.subr.mxu0 0.0
  %443 = vmatpush1.msra.mxu0 0.0
  %444 = vmatprep.subr.mxu0 0.0
  %445 = vmatpush1.msra.mxu0 0.0
  %446 = vmatprep.subr.mxu0 0.0
  %447 = vmatpush1.msra.mxu0 0.0
  %448 = vmatprep.subr.mxu0 0.0
  %449 = vmatpush1.msra.mxu0 0.0
  %450 = vmatprep.subr.mxu0 0.0
  %451 = vmatpush1.msra.mxu0 0.0
  %452 = vmatprep.subr.mxu0 0.0
  %453 = vmatpush1.msra.mxu0 %v424
  %454 = vmatprep.subr.mxu0 0.0
  %455 = vmatpush1.msra.mxu0 %v423
  %456 = vmatprep.subr.mxu0 0.0
  %457 = vmatpush1.msra.mxu0 %v422
  %458 = vmatprep.subr.mxu0 0.0
  %459 = vmatpush1.msra.mxu0 %v421
  %460 = vmatprep.subr.mxu0 0.0
  %461 = vmatpush2.msra.mxu0 0.0
  %462 = vmatprep.subr.mxu0 0.0
  %463 = vmatpush2.msra.mxu0 0.0
  %464 = vmatprep.subr.mxu0 0.0
  %465 = vmatpush2.msra.mxu0 0.0
  %466 = vmatprep.subr.mxu0 0.0
  %467 = vmatpush2.msra.mxu0 0.0
  %468 = vmatprep.subr.mxu0 0.0
  %469 = vmatpush2.msra.mxu0 0.0
  %470 = vmatprep.subr.mxu0 0.0
  %471 = vmatpush2.msra.mxu0 0.0
  %472 = vmatprep.subr.mxu0 0.0
  %473 = vmatpush2.msra.mxu0 0.0
  %474 = vmatprep.subr.mxu0 0.0
  %475 = vmatpush2.msra.mxu0 0.0
  %476 = vmatprep.subr.mxu0 0.0
  %477 = vmatpush2.msra.mxu0 0.0
  %478 = vmatprep.subr.mxu0 0.0
  %479 = vmatpush2.msra.mxu0 0.0
  %480 = vmatprep.subr.mxu0 0.0
  %481 = vmatpush2.msra.mxu0 0.0
  %482 = vmatprep.subr.mxu0 0.0
  %483 = vmatpush2.msra.mxu0 0.0
  %484 = vmatprep.subr.mxu0 0.0
  %485 = vmatpush2.msra.mxu0 0.0
  %486 = vmatprep.subr.mxu0 0.0
  %487 = vmatpush2.msra.mxu0 0.0
  %488 = vmatprep.subr.mxu0 0.0
  %489 = vmatpush2.msra.mxu0 0.0
  %490 = vmatprep.subr.mxu0 0.0
  %491 = vmatpush2.msra.mxu0 0.0
  %492 = vmatprep.mubr.f32.mxu0 0.0
  %493 = vmatmul.mubr.f32.gmra.mxu0 %v426
  %v494 = vpop.f32.mrf.mxu0
  %v495 = vadd.f32 0.0, %v494
  %v496 = vpop.f32.mrf.mxu0
  %497 = vdwg.mxu0
  %v498 = vadd.f32 %v378, %v495
  %v499 = vmul.f32 %v498, %v419
  %v500 = vtanh.pop %v499
  %v501 = vmul.f32 %v500, %v419
  %v502 = vadd.f32 %v501, %v420
  %v503 = vmul.f32 %v502, 0.0
  %505 = vrot.lane.b32.xlu0 %v502, 64
  %v506 = vpop.permute.xlu0 %505
  %v508 = vmul.f32 %v502, %v506
  %510 = vrot.lane.b32.xlu0 %v508, 32
  %v511 = vpop.permute.xlu0 %510
  %v513 = vadd.f32 %v503, %v511
  %v514 = vtanh.pop %v513
  %516 = vrot.lane.b32.xlu0 %v514, 64
  %v517 = vpop.permute.xlu0 %516
  %v519 = vmul.f32 %v502, %v517
  %521 = vrot.lane.b32.xlu0 %v519, 32
  %v522 = vpop.permute.xlu0 %521
  %v523 = vsel %vm286, %v522, 0
  %525 = vmatprep.subr.mxu0 0.0
  %526 = vmatpush1.msra.mxu0 0.0
  %527 = vmatprep.subr.mxu0 0.0
  %528 = vmatpush1.msra.mxu0 0.0
  %529 = vmatprep.subr.mxu0 0.0
  %530 = vmatpush1.msra.mxu0 0.0
  %531 = vmatprep.subr.mxu0 0.0
  %532 = vmatpush1.msra.mxu0 0.0
  %533 = vmatprep.subr.mxu0 0.0
  %534 = vmatpush1.msra.mxu0 0.0
  %535 = vmatprep.subr.mxu0 0.0
  %536 = vmatpush1.msra.mxu0 0.0
  %537 = vmatprep.subr.mxu0 0.0
  %538 = vmatpush1.msra.mxu0 0.0
  %539 = vmatprep.subr.mxu0 0.0
  %540 = vmatpush1.msra.mxu0 0.0
  %541 = vmatprep.subr.mxu0 0.0
  %542 = vmatpush1.msra.mxu0 0.0
  %543 = vmatprep.subr.mxu0 0.0
  %544 = vmatpush1.msra.mxu0 0.0
  %545 = vmatprep.subr.mxu0 0.0
  %546 = vmatpush1.msra.mxu0 0.0
  %547 = vmatprep.subr.mxu0 0.0
  %548 = vmatpush1.msra.mxu0 0.0
  %549 = vmatprep.subr.mxu0 0.0
  %550 = vmatpush1.msra.mxu0 %v424
  %551 = vmatprep.subr.mxu0 0.0
  %552 = vmatpush1.msra.mxu0 %v423
  %553 = vmatprep.subr.mxu0 0.0
  %554 = vmatpush1.msra.mxu0 %v422
  %555 = vmatprep.subr.mxu0 0.0
  %556 = vmatpush1.msra.mxu0 %v421
  %557 = vmatprep.subr.mxu0 0.0
  %558 = vmatpush2.msra.mxu0 0.0
  %559 = vmatprep.subr.mxu0 0.0
  %560 = vmatpush2.msra.mxu0 0.0
  %561 = vmatprep.subr.mxu0 0.0
  %562 = vmatpush2.msra.mxu0 0.0
  %563 = vmatprep.subr.mxu0 0.0
  %564 = vmatpush2.msra.mxu0 0.0
  %565 = vmatprep.subr.mxu0 0.0
  %566 = vmatpush2.msra.mxu0 0.0
  %567 = vmatprep.subr.mxu0 0.0
  %568 = vmatpush2.msra.mxu0 0.0
  %569 = vmatprep.subr.mxu0 0.0
  %570 = vmatpush2.msra.mxu0 0.0
  %571 = vmatprep.subr.mxu0 0.0
  %572 = vmatpush2.msra.mxu0 0.0
  %573 = vmatprep.subr.mxu0 0.0
  %574 = vmatpush2.msra.mxu0 0.0
  %575 = vmatprep.subr.mxu0 0.0
  %576 = vmatpush2.msra.mxu0 0.0
  %577 = vmatprep.subr.mxu0 0.0
  %578 = vmatpush2.msra.mxu0 0.0
  %579 = vmatprep.subr.mxu0 0.0
  %580 = vmatpush2.msra.mxu0 0.0
  %581 = vmatprep.subr.mxu0 0.0
  %582 = vmatpush2.msra.mxu0 0.0
  %583 = vmatprep.subr.mxu0 0.0
  %584 = vmatpush2.msra.mxu0 0.0
  %585 = vmatprep.subr.mxu0 0.0
  %586 = vmatpush2.msra.mxu0 0.0
  %587 = vmatprep.subr.mxu0 0.0
  %588 = vmatpush2.msra.mxu0 0.0
  %589 = vmatprep.mubr.f32.mxu0 0.0
  %590 = vmatmul.mubr.f32.gmra.mxu0 %v523
  %v591 = vpop.f32.mrf.mxu0
  %v592 = vadd.f32 0.0, %v591
  %v593 = vpop.f32.mrf.mxu0
  %594 = vdwg.mxu0
  %v595 = vadd.f32 %v383, %v592
  %v596 = vmul.f32 %v595, %v419
  %v597 = vtanh.pop %v596
  %v598 = vmul.f32 %v597, %v419
  %v599 = vadd.f32 %v598, %v420
  %v600 = vmul.f32 %v599, %v513
  %602 = vrot.lane.b32.xlu0 %v599, 64
  %v603 = vpop.permute.xlu0 %602
  %v605 = vmul.f32 %v599, %v603
  %607 = vrot.lane.b32.xlu0 %v605, 32
  %v608 = vpop.permute.xlu0 %607
  %v610 = vadd.f32 %v600, %v608
  %v611 = vtanh.pop %v610
  %613 = vrot.lane.b32.xlu0 %v611, 64
  %v614 = vpop.permute.xlu0 %613
  %v616 = vmul.f32 %v599, %v614
  %618 = vrot.lane.b32.xlu0 %v616, 32
  %v619 = vpop.permute.xlu0 %618
  %v620 = vsel %vm286, %v619, 0
  %622 = vmatprep.subr.mxu0 0.0
  %623 = vmatpush1.msra.mxu0 0.0
  %624 = vmatprep.subr.mxu0 0.0
  %625 = vmatpush1.msra.mxu0 0.0
  %626 = vmatprep.subr.mxu0 0.0
  %627 = vmatpush1.msra.mxu0 0.0
  %628 = vmatprep.subr.mxu0 0.0
  %629 = vmatpush1.msra.mxu0 0.0
  %630 = vmatprep.subr.mxu0 0.0
  %631 = vmatpush1.msra.mxu0 0.0
  %632 = vmatprep.subr.mxu0 0.0
  %633 = vmatpush1.msra.mxu0 0.0
  %634 = vmatprep.subr.mxu0 0.0
  %635 = vmatpush1.msra.mxu0 0.0
  %636 = vmatprep.subr.mxu0 0.0
  %637 = vmatpush1.msra.mxu0 0.0
  %638 = vmatprep.subr.mxu0 0.0
  %639 = vmatpush1.msra.mxu0 0.0
  %640 = vmatprep.subr.mxu0 0.0
  %641 = vmatpush1.msra.mxu0 0.0
  %642 = vmatprep.subr.mxu0 0.0
  %643 = vmatpush1.msra.mxu0 0.0
  %644 = vmatprep.subr.mxu0 0.0
  %645 = vmatpush1.msra.mxu0 0.0
  %646 = vmatprep.subr.mxu0 0.0
  %647 = vmatpush1.msra.mxu0 %v424
  %648 = vmatprep.subr.mxu0 0.0
  %649 = vmatpush1.msra.mxu0 %v423
  %650 = vmatprep.subr.mxu0 0.0
  %651 = vmatpush1.msra.mxu0 %v422
  %652 = vmatprep.subr.mxu0 0.0
  %653 = vmatpush1.msra.mxu0 %v421
  %654 = vmatprep.subr.mxu0 0.0
  %655 = vmatpush2.msra.mxu0 0.0
  %656 = vmatprep.subr.mxu0 0.0
  %657 = vmatpush2.msra.mxu0 0.0
  %658 = vmatprep.subr.mxu0 0.0
  %659 = vmatpush2.msra.mxu0 0.0
  %660 = vmatprep.subr.mxu0 0.0
  %661 = vmatpush2.msra.mxu0 0.0
  %662 = vmatprep.subr.mxu0 0.0
  %663 = vmatpush2.msra.mxu0 0.0
  %664 = vmatprep.subr.mxu0 0.0
  %665 = vmatpush2.msra.mxu0 0.0
  %666 = vmatprep.subr.mxu0 0.0
  %667 = vmatpush2.msra.mxu0 0.0
  %668 = vmatprep.subr.mxu0 0.0
  %669 = vmatpush2.msra.mxu0 0.0
  %670 = vmatprep.subr.mxu0 0.0
  %671 = vmatpush2.msra.mxu0 0.0
  %672 = vmatprep.subr.mxu0 0.0
  %673 = vmatpush2.msra.mxu0 0.0
  %674 = vmatprep.subr.mxu0 0.0
  %675 = vmatpush2.msra.mxu0 0.0
  %676 = vmatprep.subr.mxu0 0.0
  %677 = vmatpush2.msra.mxu0 0.0
  %678 = vmatprep.subr.mxu0 0.0
  %679 = vmatpush2.msra.mxu0 0.0
  %680 = vmatprep.subr.mxu0 0.0
  %681 = vmatpush2.msra.mxu0 0.0
  %682 = vmatprep.subr.mxu0 0.0
  %683 = vmatpush2.msra.mxu0 0.0
  %684 = vmatprep.subr.mxu0 0.0
  %685 = vmatpush2.msra.mxu0 0.0
  %686 = vmatprep.mubr.f32.mxu0 0.0
  %687 = vmatmul.mubr.f32.gmra.mxu0 %v620
  %v688 = vpop.f32.mrf.mxu0
  %v689 = vadd.f32 0.0, %v688
  %v690 = vpop.f32.mrf.mxu0
  %691 = vdwg.mxu0
  %v692 = vadd.f32 %v388, %v689
  %v693 = vmul.f32 %v692, %v419
  %v694 = vtanh.pop %v693
  %v695 = vmul.f32 %v694, %v419
  %v696 = vadd.f32 %v695, %v420
  %v697 = vmul.f32 %v696, %v610
  %699 = vrot.lane.b32.xlu0 %v696, 64
  %v700 = vpop.permute.xlu0 %699
  %v702 = vmul.f32 %v696, %v700
  %704 = vrot.lane.b32.xlu0 %v702, 32
  %v705 = vpop.permute.xlu0 %704
  %v707 = vadd.f32 %v697, %v705
  %v708 = vtanh.pop %v707
  %710 = vrot.lane.b32.xlu0 %v708, 64
  %v711 = vpop.permute.xlu0 %710
  %v713 = vmul.f32 %v696, %v711
  %715 = vrot.lane.b32.xlu0 %v713, 32
  %v716 = vpop.permute.xlu0 %715
  %v717 = vsel %vm286, %v716, 0
  %719 = vmatprep.subr.mxu0 0.0
  %720 = vmatpush1.msra.mxu0 0.0
  %721 = vmatprep.subr.mxu0 0.0
  %722 = vmatpush1.msra.mxu0 0.0
  %723 = vmatprep.subr.mxu0 0.0
  %724 = vmatpush1.msra.mxu0 0.0
  %725 = vmatprep.subr.mxu0 0.0
  %726 = vmatpush1.msra.mxu0 0.0
  %727 = vmatprep.subr.mxu0 0.0
  %728 = vmatpush1.msra.mxu0 0.0
  %729 = vmatprep.subr.mxu0 0.0
  %730 = vmatpush1.msra.mxu0 0.0
  %731 = vmatprep.subr.mxu0 0.0
  %732 = vmatpush1.msra.mxu0 0.0
  %733 = vmatprep.subr.mxu0 0.0
  %734 = vmatpush1.msra.mxu0 0.0
  %735 = vmatprep.subr.mxu0 0.0
  %736 = vmatpush1.msra.mxu0 0.0
  %737 = vmatprep.subr.mxu0 0.0
  %738 = vmatpush1.msra.mxu0 0.0
  %739 = vmatprep.subr.mxu0 0.0
  %740 = vmatpush1.msra.mxu0 0.0
  %741 = vmatprep.subr.mxu0 0.0
  %742 = vmatpush1.msra.mxu0 0.0
  %743 = vmatprep.subr.mxu0 0.0
  %744 = vmatpush1.msra.mxu0 %v424
  %745 = vmatprep.subr.mxu0 0.0
  %746 = vmatpush1.msra.mxu0 %v423
  %747 = vmatprep.subr.mxu0 0.0
  %748 = vmatpush1.msra.mxu0 %v422
  %749 = vmatprep.subr.mxu0 0.0
  %750 = vmatpush1.msra.mxu0 %v421
  %751 = vmatprep.subr.mxu0 0.0
  %752 = vmatpush2.msra.mxu0 0.0
  %753 = vmatprep.subr.mxu0 0.0
  %754 = vmatpush2.msra.mxu0 0.0
  %755 = vmatprep.subr.mxu0 0.0
  %756 = vmatpush2.msra.mxu0 0.0
  %757 = vmatprep.subr.mxu0 0.0
  %758 = vmatpush2.msra.mxu0 0.0
  %759 = vmatprep.subr.mxu0 0.0
  %760 = vmatpush2.msra.mxu0 0.0
  %761 = vmatprep.subr.mxu0 0.0
  %762 = vmatpush2.msra.mxu0 0.0
  %763 = vmatprep.subr.mxu0 0.0
  %764 = vmatpush2.msra.mxu0 0.0
  %765 = vmatprep.subr.mxu0 0.0
  %766 = vmatpush2.msra.mxu0 0.0
  %767 = vmatprep.subr.mxu0 0.0
  %768 = vmatpush2.msra.mxu0 0.0
  %769 = vmatprep.subr.mxu0 0.0
  %770 = vmatpush2.msra.mxu0 0.0
  %771 = vmatprep.subr.mxu0 0.0
  %772 = vmatpush2.msra.mxu0 0.0
  %773 = vmatprep.subr.mxu0 0.0
  %774 = vmatpush2.msra.mxu0 0.0
  %775 = vmatprep.subr.mxu0 0.0
  %776 = vmatpush2.msra.mxu0 0.0
  %777 = vmatprep.subr.mxu0 0.0
  %778 = vmatpush2.msra.mxu0 0.0
  %779 = vmatprep.subr.mxu0 0.0
  %780 = vmatpush2.msra.mxu0 0.0
  %781 = vmatprep.subr.mxu0 0.0
  %782 = vmatpush2.msra.mxu0 0.0
  %783 = vmatprep.mubr.f32.mxu0 0.0
  %784 = vmatmul.mubr.f32.gmra.mxu0 %v717
  %v785 = vpop.f32.mrf.mxu0
  %v786 = vadd.f32 0.0, %v785
  %v787 = vpop.f32.mrf.mxu0
  %788 = vdwg.mxu0
  %v789 = vadd.f32 %v393, %v786
  %v790 = vmul.f32 %v789, %v419
  %v791 = vtanh.pop %v790
  %v792 = vmul.f32 %v791, %v419
  %v793 = vadd.f32 %v792, %v420
  %v794 = vmul.f32 %v793, %v707
  %796 = vrot.lane.b32.xlu0 %v793, 64
  %v797 = vpop.permute.xlu0 %796
  %v799 = vmul.f32 %v793, %v797
  %801 = vrot.lane.b32.xlu0 %v799, 32
  %v802 = vpop.permute.xlu0 %801
  %v804 = vadd.f32 %v794, %v802
  %v805 = vtanh.pop %v804
  %807 = vrot.lane.b32.xlu0 %v805, 64
  %v808 = vpop.permute.xlu0 %807
  %v810 = vmul.f32 %v793, %v808
  %812 = vrot.lane.b32.xlu0 %v810, 32
  %v813 = vpop.permute.xlu0 %812
  %v814 = vsel %vm286, %v813, 0
  %816 = vmatprep.subr.mxu0 0.0
  %817 = vmatpush1.msra.mxu0 0.0
  %818 = vmatprep.subr.mxu0 0.0
  %819 = vmatpush1.msra.mxu0 0.0
  %820 = vmatprep.subr.mxu0 0.0
  %821 = vmatpush1.msra.mxu0 0.0
  %822 = vmatprep.subr.mxu0 0.0
  %823 = vmatpush1.msra.mxu0 0.0
  %824 = vmatprep.subr.mxu0 0.0
  %825 = vmatpush1.msra.mxu0 0.0
  %826 = vmatprep.subr.mxu0 0.0
  %827 = vmatpush1.msra.mxu0 0.0
  %828 = vmatprep.subr.mxu0 0.0
  %829 = vmatpush1.msra.mxu0 0.0
  %830 = vmatprep.subr.mxu0 0.0
  %831 = vmatpush1.msra.mxu0 0.0
  %832 = vmatprep.subr.mxu0 0.0
  %833 = vmatpush1.msra.mxu0 0.0
  %834 = vmatprep.subr.mxu0 0.0
  %835 = vmatpush1.msra.mxu0 0.0
  %836 = vmatprep.subr.mxu0 0.0
  %837 = vmatpush1.msra.mxu0 0.0
  %838 = vmatprep.subr.mxu0 0.0
  %839 = vmatpush1.msra.mxu0 0.0
  %840 = vmatprep.subr.mxu0 0.0
  %841 = vmatpush1.msra.mxu0 %v424
  %842 = vmatprep.subr.mxu0 0.0
  %843 = vmatpush1.msra.mxu0 %v423
  %844 = vmatprep.subr.mxu0 0.0
  %845 = vmatpush1.msra.mxu0 %v422
  %846 = vmatprep.subr.mxu0 0.0
  %847 = vmatpush1.msra.mxu0 %v421
  %848 = vmatprep.subr.mxu0 0.0
  %849 = vmatpush2.msra.mxu0 0.0
  %850 = vmatprep.subr.mxu0 0.0
  %851 = vmatpush2.msra.mxu0 0.0
  %852 = vmatprep.subr.mxu0 0.0
  %853 = vmatpush2.msra.mxu0 0.0
  %854 = vmatprep.subr.mxu0 0.0
  %855 = vmatpush2.msra.mxu0 0.0
  %856 = vmatprep.subr.mxu0 0.0
  %857 = vmatpush2.msra.mxu0 0.0
  %858 = vmatprep.subr.mxu0 0.0
  %859 = vmatpush2.msra.mxu0 0.0
  %860 = vmatprep.subr.mxu0 0.0
  %861 = vmatpush2.msra.mxu0 0.0
  %862 = vmatprep.subr.mxu0 0.0
  %863 = vmatpush2.msra.mxu0 0.0
  %864 = vmatprep.subr.mxu0 0.0
  %865 = vmatpush2.msra.mxu0 0.0
  %866 = vmatprep.subr.mxu0 0.0
  %867 = vmatpush2.msra.mxu0 0.0
  %868 = vmatprep.subr.mxu0 0.0
  %869 = vmatpush2.msra.mxu0 0.0
  %870 = vmatprep.subr.mxu0 0.0
  %871 = vmatpush2.msra.mxu0 0.0
  %872 = vmatprep.subr.mxu0 0.0
  %873 = vmatpush2.msra.mxu0 0.0
  %874 = vmatprep.subr.mxu0 0.0
  %875 = vmatpush2.msra.mxu0 0.0
  %876 = vmatprep.subr.mxu0 0.0
  %877 = vmatpush2.msra.mxu0 0.0
  %878 = vmatprep.subr.mxu0 0.0
  %879 = vmatpush2.msra.mxu0 0.0
  %880 = vmatprep.mubr.f32.mxu0 0.0
  %881 = vmatmul.mubr.f32.gmra.mxu0 %v814
  %v882 = vpop.f32.mrf.mxu0
  %v883 = vadd.f32 0.0, %v882
  %v884 = vpop.f32.mrf.mxu0
  %885 = vdwg.mxu0
  %v886 = vadd.f32 %v398, %v883
  %v887 = vmul.f32 %v886, %v419
  %v888 = vtanh.pop %v887
  %v889 = vmul.f32 %v888, %v419
  %v890 = vadd.f32 %v889, %v420
  %v891 = vmul.f32 %v890, %v804
  %893 = vrot.lane.b32.xlu0 %v890, 64
  %v894 = vpop.permute.xlu0 %893
  %v896 = vmul.f32 %v890, %v894
  %898 = vrot.lane.b32.xlu0 %v896, 32
  %v899 = vpop.permute.xlu0 %898
  %v901 = vadd.f32 %v891, %v899
  %v902 = vtanh.pop %v901
  %904 = vrot.lane.b32.xlu0 %v902, 64
  %v905 = vpop.permute.xlu0 %904
  %v907 = vmul.f32 %v890, %v905
  %909 = vrot.lane.b32.xlu0 %v907, 32
  %v910 = vpop.permute.xlu0 %909
  %v911 = vsel %vm286, %v910, 0
  %913 = vmatprep.subr.mxu0 0.0
  %914 = vmatpush1.msra.mxu0 0.0
  %915 = vmatprep.subr.mxu0 0.0
  %916 = vmatpush1.msra.mxu0 0.0
  %917 = vmatprep.subr.mxu0 0.0
  %918 = vmatpush1.msra.mxu0 0.0
  %919 = vmatprep.subr.mxu0 0.0
  %920 = vmatpush1.msra.mxu0 0.0
  %921 = vmatprep.subr.mxu0 0.0
  %922 = vmatpush1.msra.mxu0 0.0
  %923 = vmatprep.subr.mxu0 0.0
  %924 = vmatpush1.msra.mxu0 0.0
  %925 = vmatprep.subr.mxu0 0.0
  %926 = vmatpush1.msra.mxu0 0.0
  %927 = vmatprep.subr.mxu0 0.0
  %928 = vmatpush1.msra.mxu0 0.0
  %929 = vmatprep.subr.mxu0 0.0
  %930 = vmatpush1.msra.mxu0 0.0
  %931 = vmatprep.subr.mxu0 0.0
  %932 = vmatpush1.msra.mxu0 0.0
  %933 = vmatprep.subr.mxu0 0.0
  %934 = vmatpush1.msra.mxu0 0.0
  %935 = vmatprep.subr.mxu0 0.0
  %936 = vmatpush1.msra.mxu0 0.0
  %937 = vmatprep.subr.mxu0 0.0
  %938 = vmatpush1.msra.mxu0 %v424
  %939 = vmatprep.subr.mxu0 0.0
  %940 = vmatpush1.msra.mxu0 %v423
  %941 = vmatprep.subr.mxu0 0.0
  %942 = vmatpush1.msra.mxu0 %v422
  %943 = vmatprep.subr.mxu0 0.0
  %944 = vmatpush1.msra.mxu0 %v421
  %945 = vmatprep.subr.mxu0 0.0
  %946 = vmatpush2.msra.mxu0 0.0
  %947 = vmatprep.subr.mxu0 0.0
  %948 = vmatpush2.msra.mxu0 0.0
  %949 = vmatprep.subr.mxu0 0.0
  %950 = vmatpush2.msra.mxu0 0.0
  %951 = vmatprep.subr.mxu0 0.0
  %952 = vmatpush2.msra.mxu0 0.0
  %953 = vmatprep.subr.mxu0 0.0
  %954 = vmatpush2.msra.mxu0 0.0
  %955 = vmatprep.subr.mxu0 0.0
  %956 = vmatpush2.msra.mxu0 0.0
  %957 = vmatprep.subr.mxu0 0.0
  %958 = vmatpush2.msra.mxu0 0.0
  %959 = vmatprep.subr.mxu0 0.0
  %960 = vmatpush2.msra.mxu0 0.0
  %961 = vmatprep.subr.mxu0 0.0
  %962 = vmatpush2.msra.mxu0 0.0
  %963 = vmatprep.subr.mxu0 0.0
  %964 = vmatpush2.msra.mxu0 0.0
  %965 = vmatprep.subr.mxu0 0.0
  %966 = vmatpush2.msra.mxu0 0.0
  %967 = vmatprep.subr.mxu0 0.0
  %968 = vmatpush2.msra.mxu0 0.0
  %969 = vmatprep.subr.mxu0 0.0
  %970 = vmatpush2.msra.mxu0 0.0
  %971 = vmatprep.subr.mxu0 0.0
  %972 = vmatpush2.msra.mxu0 0.0
  %973 = vmatprep.subr.mxu0 0.0
  %974 = vmatpush2.msra.mxu0 0.0
  %975 = vmatprep.subr.mxu0 0.0
  %976 = vmatpush2.msra.mxu0 0.0
  %977 = vmatprep.mubr.f32.mxu0 0.0
  %978 = vmatmul.mubr.f32.gmra.mxu0 %v911
  %v979 = vpop.f32.mrf.mxu0
  %v980 = vadd.f32 0.0, %v979
  %v981 = vpop.f32.mrf.mxu0
  %982 = vdwg.mxu0
  %v983 = vadd.f32 %v403, %v980
  %v984 = vmul.f32 %v983, %v419
  %v985 = vtanh.pop %v984
  %v986 = vmul.f32 %v985, %v419
  %v987 = vadd.f32 %v986, %v420
  %v988 = vmul.f32 %v987, %v901
  %990 = vrot.lane.b32.xlu0 %v987, 64
  %v991 = vpop.permute.xlu0 %990
  %v993 = vmul.f32 %v987, %v991
  %995 = vrot.lane.b32.xlu0 %v993, 32
  %v996 = vpop.permute.xlu0 %995
  %v998 = vadd.f32 %v988, %v996
  %v999 = vtanh.pop %v998
  %1001 = vrot.lane.b32.xlu0 %v999, 64
  %v1002 = vpop.permute.xlu0 %1001
  %v1004 = vmul.f32 %v987, %v1002
  %1006 = vrot.lane.b32.xlu0 %v1004, 32
  %v1007 = vpop.permute.xlu0 %1006
  %v1008 = vsel %vm286, %v1007, 0
  %1010 = vmatprep.subr.mxu0 0.0
  %1011 = vmatpush1.msra.mxu0 0.0
  %1012 = vmatprep.subr.mxu0 0.0
  %1013 = vmatpush1.msra.mxu0 0.0
  %1014 = vmatprep.subr.mxu0 0.0
  %1015 = vmatpush1.msra.mxu0 0.0
  %1016 = vmatprep.subr.mxu0 0.0
  %1017 = vmatpush1.msra.mxu0 0.0
  %1018 = vmatprep.subr.mxu0 0.0
  %1019 = vmatpush1.msra.mxu0 0.0
  %1020 = vmatprep.subr.mxu0 0.0
  %1021 = vmatpush1.msra.mxu0 0.0
  %1022 = vmatprep.subr.mxu0 0.0
  %1023 = vmatpush1.msra.mxu0 0.0
  %1024 = vmatprep.subr.mxu0 0.0
  %1025 = vmatpush1.msra.mxu0 0.0
  %1026 = vmatprep.subr.mxu0 0.0
  %1027 = vmatpush1.msra.mxu0 0.0
  %1028 = vmatprep.subr.mxu0 0.0
  %1029 = vmatpush1.msra.mxu0 0.0
  %1030 = vmatprep.subr.mxu0 0.0
  %1031 = vmatpush1.msra.mxu0 0.0
  %1032 = vmatprep.subr.mxu0 0.0
  %1033 = vmatpush1.msra.mxu0 0.0
  %1034 = vmatprep.subr.mxu0 0.0
  %1035 = vmatpush1.msra.mxu0 %v424
  %1036 = vmatprep.subr.mxu0 0.0
  %1037 = vmatpush1.msra.mxu0 %v423
  %1038 = vmatprep.subr.mxu0 0.0
  %1039 = vmatpush1.msra.mxu0 %v422
  %1040 = vmatprep.subr.mxu0 0.0
  %1041 = vmatpush1.msra.mxu0 %v421
  %1042 = vmatprep.subr.mxu0 0.0
  %1043 = vmatpush2.msra.mxu0 0.0
  %1044 = vmatprep.subr.mxu0 0.0
  %1045 = vmatpush2.msra.mxu0 0.0
  %1046 = vmatprep.subr.mxu0 0.0
  %1047 = vmatpush2.msra.mxu0 0.0
  %1048 = vmatprep.subr.mxu0 0.0
  %1049 = vmatpush2.msra.mxu0 0.0
  %1050 = vmatprep.subr.mxu0 0.0
  %1051 = vmatpush2.msra.mxu0 0.0
  %1052 = vmatprep.subr.mxu0 0.0
  %1053 = vmatpush2.msra.mxu0 0.0
  %1054 = vmatprep.subr.mxu0 0.0
  %1055 = vmatpush2.msra.mxu0 0.0
  %1056 = vmatprep.subr.mxu0 0.0
  %1057 = vmatpush2.msra.mxu0 0.0
  %1058 = vmatprep.subr.mxu0 0.0
  %1059 = vmatpush2.msra.mxu0 0.0
  %1060 = vmatprep.subr.mxu0 0.0
  %1061 = vmatpush2.msra.mxu0 0.0
  %1062 = vmatprep.subr.mxu0 0.0
  %1063 = vmatpush2.msra.mxu0 0.0
  %1064 = vmatprep.subr.mxu0 0.0
  %1065 = vmatpush2.msra.mxu0 0.0
  %1066 = vmatprep.subr.mxu0 0.0
  %1067 = vmatpush2.msra.mxu0 0.0
  %1068 = vmatprep.subr.mxu0 0.0
  %1069 = vmatpush2.msra.mxu0 0.0
  %1070 = vmatprep.subr.mxu0 0.0
  %1071 = vmatpush2.msra.mxu0 0.0
  %1072 = vmatprep.subr.mxu0 0.0
  %1073 = vmatpush2.msra.mxu0 0.0
  %1074 = vmatprep.mubr.f32.mxu0 0.0
  %1075 = vmatmul.mubr.f32.gmra.mxu0 %v1008
  %v1076 = vpop.f32.mrf.mxu0
  %v1077 = vadd.f32 0.0, %v1076
  %v1078 = vpop.f32.mrf.mxu0
  %1079 = vdwg.mxu0
  %v1080 = vadd.f32 %v408, %v1077
  %v1081 = vmul.f32 %v1080, %v419
  %v1082 = vtanh.pop %v1081
  %v1083 = vmul.f32 %v1082, %v419
  %v1084 = vadd.f32 %v1083, %v420
  %v1085 = vmul.f32 %v1084, %v998
  %1087 = vrot.lane.b32.xlu0 %v1084, 64
  %v1088 = vpop.permute.xlu0 %1087
  %v1090 = vmul.f32 %v1084, %v1088
  %1092 = vrot.lane.b32.xlu0 %v1090, 32
  %v1093 = vpop.permute.xlu0 %1092
  %v1095 = vadd.f32 %v1085, %v1093
  %v1096 = vtanh.pop %v1095
  %1098 = vrot.lane.b32.xlu0 %v1096, 64
  %v1099 = vpop.permute.xlu0 %1098
  %v1101 = vmul.f32 %v1084, %v1099
  %1103 = vrot.lane.b32.xlu0 %v1101, 32
  %v1104 = vpop.permute.xlu0 %1103
  %v1105 = vsel %vm286, %v1104, 0
  %1107 = vmatprep.subr.mxu0 0.0
  %1108 = vmatpush1.msra.mxu0 0.0
  %1109 = vmatprep.subr.mxu0 0.0
  %1110 = vmatpush1.msra.mxu0 0.0
  %1111 = vmatprep.subr.mxu0 0.0
  %1112 = vmatpush1.msra.mxu0 0.0
  %1113 = vmatprep.subr.mxu0 0.0
  %1114 = vmatpush1.msra.mxu0 0.0
  %1115 = vmatprep.subr.mxu0 0.0
  %1116 = vmatpush1.msra.mxu0 0.0
  %1117 = vmatprep.subr.mxu0 0.0
  %1118 = vmatpush1.msra.mxu0 0.0
  %1119 = vmatprep.subr.mxu0 0.0
  %1120 = vmatpush1.msra.mxu0 0.0
  %1121 = vmatprep.subr.mxu0 0.0
  %1122 = vmatpush1.msra.mxu0 0.0
  %1123 = vmatprep.subr.mxu0 0.0
  %1124 = vmatpush1.msra.mxu0 0.0
  %1125 = vmatprep.subr.mxu0 0.0
  %1126 = vmatpush1.msra.mxu0 0.0
  %1127 = vmatprep.subr.mxu0 0.0
  %1128 = vmatpush1.msra.mxu0 0.0
  %1129 = vmatprep.subr.mxu0 0.0
  %1130 = vmatpush1.msra.mxu0 0.0
  %1131 = vmatprep.subr.mxu0 0.0
  %1132 = vmatpush1.msra.mxu0 %v424
  %1133 = vmatprep.subr.mxu0 0.0
  %1134 = vmatpush1.msra.mxu0 %v423
  %1135 = vmatprep.subr.mxu0 0.0
  %1136 = vmatpush1.msra.mxu0 %v422
  %1137 = vmatprep.subr.mxu0 0.0
  %1138 = vmatpush1.msra.mxu0 %v421
  %1139 = vmatprep.subr.mxu0 0.0
  %1140 = vmatpush2.msra.mxu0 0.0
  %1141 = vmatprep.subr.mxu0 0.0
  %1142 = vmatpush2.msra.mxu0 0.0
  %1143 = vmatprep.subr.mxu0 0.0
  %1144 = vmatpush2.msra.mxu0 0.0
  %1145 = vmatprep.subr.mxu0 0.0
  %1146 = vmatpush2.msra.mxu0 0.0
  %1147 = vmatprep.subr.mxu0 0.0
  %1148 = vmatpush2.msra.mxu0 0.0
  %1149 = vmatprep.subr.mxu0 0.0
  %1150 = vmatpush2.msra.mxu0 0.0
  %1151 = vmatprep.subr.mxu0 0.0
  %1152 = vmatpush2.msra.mxu0 0.0
  %1153 = vmatprep.subr.mxu0 0.0
  %1154 = vmatpush2.msra.mxu0 0.0
  %1155 = vmatprep.subr.mxu0 0.0
  %1156 = vmatpush2.msra.mxu0 0.0
  %1157 = vmatprep.subr.mxu0 0.0
  %1158 = vmatpush2.msra.mxu0 0.0
  %1159 = vmatprep.subr.mxu0 0.0
  %1160 = vmatpush2.msra.mxu0 0.0
  %1161 = vmatprep.subr.mxu0 0.0
  %1162 = vmatpush2.msra.mxu0 0.0
  %1163 = vmatprep.subr.mxu0 0.0
  %1164 = vmatpush2.msra.mxu0 0.0
  %1165 = vmatprep.subr.mxu0 0.0
  %1166 = vmatpush2.msra.mxu0 0.0
  %1167 = vmatprep.subr.mxu0 0.0
  %1168 = vmatpush2.msra.mxu0 0.0
  %1169 = vmatprep.subr.mxu0 0.0
  %1170 = vmatpush2.msra.mxu0 0.0
  %1171 = vmatprep.mubr.f32.mxu0 0.0
  %1172 = vmatmul.mubr.f32.gmra.mxu0 %v1105
  %v1173 = vpop.f32.mrf.mxu0
  %v1174 = vadd.f32 0.0, %v1173
  %v1175 = vpop.f32.mrf.mxu0
  %1176 = vdwg.mxu0
  %v1177 = vadd.f32 %v413, %v1174
  %v1178 = vmul.f32 %v1177, %v419
  %v1179 = vtanh.pop %v1178
  %v1180 = vmul.f32 %v1179, %v419
  %v1181 = vadd.f32 %v1180, %v420
  %v1182 = vmul.f32 %v1181, %v1095
  %1184 = vrot.lane.b32.xlu0 %v1181, 64
  %v1185 = vpop.permute.xlu0 %1184
  %v1187 = vmul.f32 %v1181, %v1185
  %1189 = vrot.lane.b32.xlu0 %v1187, 32
  %v1190 = vpop.permute.xlu0 %1189
  %v1192 = vadd.f32 %v1182, %v1190
  %v1193 = vtanh.pop %v1192
  %1195 = vrot.lane.b32.xlu0 %v1193, 64
  %v1196 = vpop.permute.xlu0 %1195
  %v1198 = vmul.f32 %v1181, %v1196
  %1200 = vrot.lane.b32.xlu0 %v1198, 32
  %v1201 = vpop.permute.xlu0 %1200
  %1210 = vst.msk [vmem:[%s6] sm:$0xff] %vm286, %v522
  %1211 = vst.msk [vmem:[%s6 + $0x8] sm:$0xff] %vm286, %v619
  %1212 = vst.msk [vmem:[%s6 + $0x10] sm:$0xff] %vm286, %v716
  %1213 = vst.msk [vmem:[%s6 + $0x18] sm:$0xff] %vm286, %v813
  %1214 = vst.msk [vmem:[%s6 + $0x20] sm:$0xff] %vm286, %v910
  %1215 = vst.msk [vmem:[%s6 + $0x28] sm:$0xff] %vm286, %v1007
  %1216 = vst.msk [vmem:[%s6 + $0x30] sm:$0xff] %vm286, %v1104
  %1217 = vst.msk [vmem:[%s6 + $0x38] sm:$0xff] %vm286, %v1201
  // Predicated region
  $region26: #{tpu_custom_call.1} parent=0 // pred_check
    _
  $region27: #{tpu_custom_call.1} parent=0 // pred_check_branch
    %1219 = sbr.rel (0) target = $region29
  $region28: #{tpu_custom_call.1} parent=0 // pred_region
    _
  $region29: #{tpu_custom_call.1} parent=0 // pred_fallthru
    _
  // Predicated region
  $region30: #{tpu_custom_call.1} parent=0 // pred_check
    _
  $region31: #{tpu_custom_call.1} parent=0 // pred_check_branch
    %1221 = sbr.rel (0) target = $region33
  $region32: #{tpu_custom_call.1} parent=0 // pred_region
    _
  $region33: #{tpu_custom_call.1} parent=0 // pred_fallthru
    _

</llo_original>
